<compile_context>
chip_gen: v5e
topology: v5e:2x2
jax: 0.10.0
libtpu: 0.0.40
codegen_flags: <defaults>
</compile_context>

<pallas_src>
import functools

import numpy as np
import jax
import jax.numpy as jnp
from jax.experimental import pallas as pl
from jax.experimental.pallas import tpu as pltpu

NEG_SLOPE = 0.2        # LeakyReLU slope used by VQEncoderV6 / ResBlock
LANE = 128


def _leaky_relu(x):
    return jnp.where(x >= 0, x, NEG_SLOPE * x)


def _conv1d_taps(x, w_ref, b_ref, prev_mask, next_mask):
    """'same' Conv1d(k=3, s=1, p=1) on flattened (rows, C_in) rows.

    out[t] = x[t-1] @ W0 + x[t] @ W1 + x[t+1] @ W2 + b, with zero padding at
    every per-batch segment boundary.  Temporal shifts use pltpu.roll on the
    sublane axis; the wraparound rows are zeroed by (rows, C_out) 0/1 masks
    applied to the shifted-tap outputs.  Accumulated into a single buffer.
    """
    rows = x.shape[0]
    y = jnp.dot(x, w_ref[1], preferred_element_type=jnp.float32) + b_ref[...]
    # row t of roll(x, 1) is x[t-1]; wraparound masked off at segment starts.
    y = y + prev_mask * jnp.dot(pltpu.roll(x, 1, axis=0), w_ref[0],
                                preferred_element_type=jnp.float32)
    # row t of roll(x, rows-1) is x[t+1]; wraparound masked at segment ends.
    y = y + next_mask * jnp.dot(pltpu.roll(x, rows - 1, axis=0), w_ref[2],
                                preferred_element_type=jnp.float32)
    return y


def vq_encoder_kernel(*refs, seq_len, n_down):
    x_ref = refs[0]
    out_ref = refs[-1]
    w_refs = refs[1:-1]                       # 6 refs per down-block

    rows, c_out = out_ref.shape               # rows per tile (multiple of seq_len)

    # Per-row boundary masks (constant across lanes); O(rows * c_out) work,
    # built once per tile and reused by every conv in the stack.
    pos = jax.lax.broadcasted_iota(jnp.int32, (rows, c_out), 0) % seq_len
    prev_mask = (pos > 0).astype(jnp.float32)              # 0 at segment starts
    next_mask = (pos < seq_len - 1).astype(jnp.float32)    # 0 at segment ends

    x = x_ref[...]
    for i in range(n_down):
        w_in, b_in, w_r1, b_r1, w_r2, b_r2 = w_refs[6 * i:6 * (i + 1)]
        # Conv1d + LeakyReLU
        x = _leaky_relu(_conv1d_taps(x, w_in, b_in, prev_mask, next_mask))
        # ResBlock: conv -> LeakyReLU -> conv, plus skip connection
        r = _leaky_relu(_conv1d_taps(x, w_r1, b_r1, prev_mask, next_mask))
        r = _conv1d_taps(r, w_r2, b_r2, prev_mask, next_mask)
        x = x + r

    out_ref[...] = x


# ---------------------------------------------------------------------------
# Wrapper: channel padding, row tiling, pallas_call.
# ---------------------------------------------------------------------------
def _round_up(n, m):
    return ((n + m - 1) // m) * m


def _pad_axis(a, axis, new_size):
    pad = new_size - a.shape[axis]
    if pad == 0:
        return a
    widths = [(0, 0)] * a.ndim
    widths[axis] = (0, pad)
    return jnp.pad(a, widths)


def vq_encoder_forward(x, params, *, max_rows_per_tile=1024):
    """x: (B, T, vae_test_dim) float32 -> (B, T, vae_length) float32."""
    B, T, c_in = x.shape
    n_down = len(params)
    c_out = params[-1][-2].shape[-1]              # vae_length

    # Lane-dense channel padding: padded input channels are zero and padded
    # weight rows/cols are zero, so padded output channels stay exactly zero.
    c_in_p = _round_up(c_in, LANE)
    c_hid_p = _round_up(c_out, LANE)

    flat_params = []
    for (w_in, b_in, w_r1, b_r1, w_r2, b_r2) in params:
        flat_params += [
            _pad_axis(_pad_axis(w_in, 1, _round_up(w_in.shape[1], LANE)), 2, c_hid_p),
            _pad_axis(b_in, 1, c_hid_p),
            _pad_axis(_pad_axis(w_r1, 1, c_hid_p), 2, c_hid_p),
            _pad_axis(b_r1, 1, c_hid_p),
            _pad_axis(_pad_axis(w_r2, 1, c_hid_p), 2, c_hid_p),
            _pad_axis(b_r2, 1, c_hid_p),
        ]
    x_flat = _pad_axis(x, 2, c_in_p).reshape(B * T, c_in_p)

    # Row tiling: whole batch segments per tile, so tile boundaries coincide
    # with segment boundaries (the roll+mask conv needs no halo).
    rows_total = B * T
    b_per_tile = B                                # fallback: single whole-array tile
    for cand in range(B, 0, -1):
        if B % cand:
            continue
        rows = cand * T
        if rows <= max_rows_per_tile and rows % 8 == 0:
            b_per_tile = cand
            break
    rows_per_tile = b_per_tile * T
    num_tiles = rows_total // rows_per_tile

    x_spec = pl.BlockSpec((rows_per_tile, c_in_p), lambda i: (i, 0))
    # Constant index_map -> weights stay resident in VMEM across the grid.
    w_specs = [pl.BlockSpec(p.shape, (lambda i, nd=p.ndim: (0,) * nd))
               for p in flat_params]
    out_spec = pl.BlockSpec((rows_per_tile, c_hid_p), lambda i: (i, 0))

    # VMEM budget: resident weights + a handful of (double-buffered) row tiles,
    # with headroom; capped well under v7x's 64 MiB physical VMEM.
    tile_bytes = rows_per_tile * max(c_in_p, c_hid_p) * 4
    weight_bytes = sum(int(p.size) * 4 for p in flat_params)
    vmem_limit = int(min(48 << 20,
                         max(weight_bytes + 16 * tile_bytes + (2 << 20), 16 << 20)))

    kernel = functools.partial(vq_encoder_kernel, seq_len=T, n_down=n_down)
    out_flat = pl.pallas_call(
        kernel,
        out_shape=jax.ShapeDtypeStruct((rows_total, c_hid_p), jnp.float32),
        grid=(num_tiles,),
        in_specs=[x_spec] + w_specs,
        out_specs=out_spec,
        compiler_params=pltpu.CompilerParams(
            dimension_semantics=("parallel",),
            vmem_limit_bytes=vmem_limit),
    )(x_flat, *flat_params)
    return out_flat[:, :c_out].reshape(B, T, c_out)


# ---------------------------------------------------------------------------
# Deterministic parameter init (weights stored tap-major, pre-transposed) and
# a pure-JAX reference for verification.
# ---------------------------------------------------------------------------
def init_params(key, vae_test_dim, vae_length, n_down):
    """Per-block params: (w_in, b_in, w_r1, b_r1, w_r2, b_r2).

    Conv weights: (3, C_in, C_out), i.e. w[k] == torch_weight[:, :, k].T.
    Biases: (1, C_out).
    """
    blocks = []
    keys = iter(jax.random.split(key, n_down * 6))

    def conv_w(c_in, c_out):
        scale = 1.0 / np.sqrt(3 * c_in)
        return jax.random.normal(next(keys), (3, c_in, c_out), jnp.float32) * scale

    def conv_b(c_out):
        return jax.random.normal(next(keys), (1, c_out), jnp.float32) * 0.02

    c_prev = vae_test_dim
    for _ in range(n_down):
        blocks.append((
            conv_w(c_prev, vae_length), conv_b(vae_length),
            conv_w(vae_length, vae_length), conv_b(vae_length),
            conv_w(vae_length, vae_length), conv_b(vae_length),
        ))
        c_prev = vae_length
    return blocks


def _conv1d_ref(x, w, b):
    xp = jnp.pad(x, ((0, 0), (1, 1), (0, 0)))
    hp = jax.lax.Precision.HIGHEST
    return (jnp.einsum("btc,cd->btd", xp[:, :-2], w[0], precision=hp)
            + jnp.einsum("btc,cd->btd", xp[:, 1:-1], w[1], precision=hp)
            + jnp.einsum("btc,cd->btd", xp[:, 2:], w[2], precision=hp)
            + b)


def reference_forward(x, params):
    for (w_in, b_in, w_r1, b_r1, w_r2, b_r2) in params:
        x = _leaky_relu(_conv1d_ref(x, w_in, b_in))
        r = _leaky_relu(_conv1d_ref(x, w_r1, b_r1))
        r = _conv1d_ref(r, w_r2, b_r2)
        x = x + r
    return x


if __name__ == "__main__":
    B = 4
    SEQ_LEN = 16          # temporal length of the motion clip
    VAE_TEST_DIM = 16     # args.vae_test_dim  (input feature size)
    VAE_LENGTH = 32       # args.vae_length    (hidden channels)
    VAE_LAYER = 2         # args.vae_layer     (n_down)

    key = jax.random.PRNGKey(0)
    kp, kx = jax.random.split(key)
    params = init_params(kp, VAE_TEST_DIM, VAE_LENGTH, VAE_LAYER)
    x = jax.random.normal(kx, (B, SEQ_LEN, VAE_TEST_DIM), jnp.float32)

    # 2 batch segments per tile -> grid of 2 steps (exercises the pipelined,
    # tiled path as well as the segment-boundary masking).
    out = jax.block_until_ready(
        vq_encoder_forward(x, params, max_rows_per_tile=2 * SEQ_LEN))
    ref = jax.block_until_ready(reference_forward(x, params))

    assert out.shape == (B, SEQ_LEN, VAE_LENGTH)
    np.testing.assert_allclose(np.asarray(out), np.asarray(ref),
                               atol=2e-3, rtol=2e-3)
    print("KERNEL_OK")
</pallas_src>

<mosaic_0001>
module attributes {stable_mosaic.version = 11 : i64} {
  func.func @vq_encoder_kernel(%arg0: i32, %arg1: memref<32x128xf32, #tpu.memory_space<vmem>>, %arg2: memref<3x128x128xf32, #tpu.memory_space<vmem>>, %arg3: memref<1x128xf32, #tpu.memory_space<vmem>>, %arg4: memref<3x128x128xf32, #tpu.memory_space<vmem>>, %arg5: memref<1x128xf32, #tpu.memory_space<vmem>>, %arg6: memref<3x128x128xf32, #tpu.memory_space<vmem>>, %arg7: memref<1x128xf32, #tpu.memory_space<vmem>>, %arg8: memref<3x128x128xf32, #tpu.memory_space<vmem>>, %arg9: memref<1x128xf32, #tpu.memory_space<vmem>>, %arg10: memref<3x128x128xf32, #tpu.memory_space<vmem>>, %arg11: memref<1x128xf32, #tpu.memory_space<vmem>>, %arg12: memref<3x128x128xf32, #tpu.memory_space<vmem>>, %arg13: memref<1x128xf32, #tpu.memory_space<vmem>>, %arg14: memref<32x128xf32, #tpu.memory_space<vmem>>) attributes {dimension_semantics = [#tpu.dimension_semantics<parallel>], iteration_bounds = array<i64: 2>, scalar_prefetch = 0 : i64, scratch_operands = 0 : i64, tpu.core_type = #tpu.core_type<tc>, window_params = [{transform_indices = @transform_0, window_bounds = array<i64: 32, 128>}, {pipeline_mode = #tpu.pipeline_mode<synchronous>, transform_indices = @transform_1, window_bounds = array<i64: 3, 128, 128>}, {pipeline_mode = #tpu.pipeline_mode<synchronous>, transform_indices = @transform_2, window_bounds = array<i64: 1, 128>}, {pipeline_mode = #tpu.pipeline_mode<synchronous>, transform_indices = @transform_3, window_bounds = array<i64: 3, 128, 128>}, {pipeline_mode = #tpu.pipeline_mode<synchronous>, transform_indices = @transform_4, window_bounds = array<i64: 1, 128>}, {pipeline_mode = #tpu.pipeline_mode<synchronous>, transform_indices = @transform_5, window_bounds = array<i64: 3, 128, 128>}, {pipeline_mode = #tpu.pipeline_mode<synchronous>, transform_indices = @transform_6, window_bounds = array<i64: 1, 128>}, {pipeline_mode = #tpu.pipeline_mode<synchronous>, transform_indices = @transform_7, window_bounds = array<i64: 3, 128, 128>}, {pipeline_mode = #tpu.pipeline_mode<synchronous>, transform_indices = @transform_8, window_bounds = array<i64: 1, 128>}, {pipeline_mode = #tpu.pipeline_mode<synchronous>, transform_indices = @transform_9, window_bounds = array<i64: 3, 128, 128>}, {pipeline_mode = #tpu.pipeline_mode<synchronous>, transform_indices = @transform_10, window_bounds = array<i64: 1, 128>}, {pipeline_mode = #tpu.pipeline_mode<synchronous>, transform_indices = @transform_11, window_bounds = array<i64: 3, 128, 128>}, {pipeline_mode = #tpu.pipeline_mode<synchronous>, transform_indices = @transform_12, window_bounds = array<i64: 1, 128>}, {transform_indices = @transform_13, window_bounds = array<i64: 32, 128>}]} {
    %0 = tpu.iota {dimensions = array<i32: 0>} : vector<32x128xi32>
    %c16_i32 = arith.constant 16 : i32
    %c0_i32 = arith.constant 0 : i32
    %1 = arith.cmpi eq, %c16_i32, %c0_i32 : i32
    %c1_i32 = arith.constant 1 : i32
    %2 = arith.select %1, %c1_i32, %c16_i32 : i32
    %3 = vector.broadcast %2 : i32 to vector<32x128xi32>
    %4 = arith.remsi %0, %3 : vector<32x128xi32>
    %c0_i32_0 = arith.constant 0 : i32
    %5 = vector.broadcast %c0_i32_0 : i32 to vector<32x128xi32>
    %6 = arith.cmpi ne, %4, %5 : vector<32x128xi32>
    %c0_i32_1 = arith.constant 0 : i32
    %7 = vector.broadcast %c0_i32_1 : i32 to vector<32x128xi32>
    %8 = arith.cmpi slt, %4, %7 : vector<32x128xi32>
    %c0_i32_2 = arith.constant 0 : i32
    %9 = arith.cmpi slt, %2, %c0_i32_2 : i32
    %10 = vector.broadcast %9 : i1 to vector<32x128xi1>
    %11 = vector.broadcast %10 : vector<32x128xi1> to vector<32x128xi1>
    %12 = arith.xori %8, %11 : vector<32x128xi1>
    %13 = arith.andi %12, %6 : vector<32x128xi1>
    %14 = vector.broadcast %2 : i32 to vector<32x128xi32>
    %15 = arith.addi %4, %14 : vector<32x128xi32>
    %16 = arith.select %13, %15, %4 : vector<32x128xi1>, vector<32x128xi32>
    %c0_i32_3 = arith.constant 0 : i32
    %17 = vector.broadcast %c0_i32_3 : i32 to vector<32x128xi32>
    %18 = arith.cmpi sgt, %16, %17 : vector<32x128xi32>
    %19 = arith.extui %18 : vector<32x128xi1> to vector<32x128xi32>
    %20 = arith.sitofp %19 : vector<32x128xi32> to vector<32x128xf32>
    %c15_i32 = arith.constant 15 : i32
    %21 = vector.broadcast %c15_i32 : i32 to vector<32x128xi32>
    %22 = arith.cmpi slt, %16, %21 : vector<32x128xi32>
    %23 = arith.extui %22 : vector<32x128xi1> to vector<32x128xi32>
    %24 = arith.sitofp %23 : vector<32x128xi32> to vector<32x128xf32>
    %c0 = arith.constant 0 : index
    %c0_4 = arith.constant 0 : index
    %25 = vector.load %arg1[%c0, %c0_4] : memref<32x128xf32, #tpu.memory_space<vmem>>, vector<32x128xf32>
    %c1 = arith.constant 1 : index
    %c0_5 = arith.constant 0 : index
    %c0_6 = arith.constant 0 : index
    %26 = vector.load %arg2[%c1, %c0_5, %c0_6] : memref<3x128x128xf32, #tpu.memory_space<vmem>>, vector<1x128x128xf32>
    %27 = vector.shape_cast %26 : vector<1x128x128xf32> to vector<128x128xf32>
    %cst = arith.constant dense<0.000000e+00> : vector<32x128xf32>
    %28 = tpu.matmul %25, %27, %cst {dimension_numbers = #tpu.dot_dimension_numbers<[1], [0], [0], [1], [0, 0, 1, 1], [], []>} : vector<32x128xf32>, vector<128x128xf32>, vector<32x128xf32> -> vector<32x128xf32>
    %c0_7 = arith.constant 0 : index
    %c0_8 = arith.constant 0 : index
    %29 = vector.load %arg3[%c0_7, %c0_8] : memref<1x128xf32, #tpu.memory_space<vmem>>, vector<1x128xf32>
    %30 = vector.broadcast %29 : vector<1x128xf32> to vector<32x128xf32>
    %31 = arith.addf %28, %30 : vector<32x128xf32>
    %c1_i32_9 = arith.constant 1 : i32
    %32 = tpu.dynamic_rotate %25 by %c1_i32_9 dim 0 : vector<32x128xf32>, i32 -> vector<32x128xf32>
    %c0_10 = arith.constant 0 : index
    %c0_11 = arith.constant 0 : index
    %c0_12 = arith.constant 0 : index
    %33 = vector.load %arg2[%c0_10, %c0_11, %c0_12] : memref<3x128x128xf32, #tpu.memory_space<vmem>>, vector<1x128x128xf32>
    %34 = vector.shape_cast %33 : vector<1x128x128xf32> to vector<128x128xf32>
    %cst_13 = arith.constant dense<0.000000e+00> : vector<32x128xf32>
    %35 = tpu.matmul %32, %34, %cst_13 {dimension_numbers = #tpu.dot_dimension_numbers<[1], [0], [0], [1], [0, 0, 1, 1], [], []>} : vector<32x128xf32>, vector<128x128xf32>, vector<32x128xf32> -> vector<32x128xf32>
    %36 = arith.mulf %20, %35 : vector<32x128xf32>
    %37 = arith.addf %31, %36 : vector<32x128xf32>
    %c31_i32 = arith.constant 31 : i32
    %38 = tpu.dynamic_rotate %25 by %c31_i32 dim 0 : vector<32x128xf32>, i32 -> vector<32x128xf32>
    %c2 = arith.constant 2 : index
    %c0_14 = arith.constant 0 : index
    %c0_15 = arith.constant 0 : index
    %39 = vector.load %arg2[%c2, %c0_14, %c0_15] : memref<3x128x128xf32, #tpu.memory_space<vmem>>, vector<1x128x128xf32>
    %40 = vector.shape_cast %39 : vector<1x128x128xf32> to vector<128x128xf32>
    %cst_16 = arith.constant dense<0.000000e+00> : vector<32x128xf32>
    %41 = tpu.matmul %38, %40, %cst_16 {dimension_numbers = #tpu.dot_dimension_numbers<[1], [0], [0], [1], [0, 0, 1, 1], [], []>} : vector<32x128xf32>, vector<128x128xf32>, vector<32x128xf32> -> vector<32x128xf32>
    %42 = arith.mulf %24, %41 : vector<32x128xf32>
    %43 = arith.addf %37, %42 : vector<32x128xf32>
    %cst_17 = arith.constant 0.000000e+00 : f32
    %44 = vector.broadcast %cst_17 : f32 to vector<32x128xf32>
    %45 = arith.cmpf oge, %43, %44 : vector<32x128xf32>
    %cst_18 = arith.constant 2.000000e-01 : f32
    %46 = vector.broadcast %cst_18 : f32 to vector<32x128xf32>
    %47 = arith.mulf %46, %43 : vector<32x128xf32>
    %48 = arith.select %45, %43, %47 : vector<32x128xi1>, vector<32x128xf32>
    %c1_19 = arith.constant 1 : index
    %c0_20 = arith.constant 0 : index
    %c0_21 = arith.constant 0 : index
    %49 = vector.load %arg4[%c1_19, %c0_20, %c0_21] : memref<3x128x128xf32, #tpu.memory_space<vmem>>, vector<1x128x128xf32>
    %50 = vector.shape_cast %49 : vector<1x128x128xf32> to vector<128x128xf32>
    %cst_22 = arith.constant dense<0.000000e+00> : vector<32x128xf32>
    %51 = tpu.matmul %48, %50, %cst_22 {dimension_numbers = #tpu.dot_dimension_numbers<[1], [0], [0], [1], [0, 0, 1, 1], [], []>} : vector<32x128xf32>, vector<128x128xf32>, vector<32x128xf32> -> vector<32x128xf32>
    %c0_23 = arith.constant 0 : index
    %c0_24 = arith.constant 0 : index
    %52 = vector.load %arg5[%c0_23, %c0_24] : memref<1x128xf32, #tpu.memory_space<vmem>>, vector<1x128xf32>
    %53 = vector.broadcast %52 : vector<1x128xf32> to vector<32x128xf32>
    %54 = arith.addf %51, %53 : vector<32x128xf32>
    %c1_i32_25 = arith.constant 1 : i32
    %55 = tpu.dynamic_rotate %48 by %c1_i32_25 dim 0 : vector<32x128xf32>, i32 -> vector<32x128xf32>
    %c0_26 = arith.constant 0 : index
    %c0_27 = arith.constant 0 : index
    %c0_28 = arith.constant 0 : index
    %56 = vector.load %arg4[%c0_26, %c0_27, %c0_28] : memref<3x128x128xf32, #tpu.memory_space<vmem>>, vector<1x128x128xf32>
    %57 = vector.shape_cast %56 : vector<1x128x128xf32> to vector<128x128xf32>
    %cst_29 = arith.constant dense<0.000000e+00> : vector<32x128xf32>
    %58 = tpu.matmul %55, %57, %cst_29 {dimension_numbers = #tpu.dot_dimension_numbers<[1], [0], [0], [1], [0, 0, 1, 1], [], []>} : vector<32x128xf32>, vector<128x128xf32>, vector<32x128xf32> -> vector<32x128xf32>
    %59 = arith.mulf %20, %58 : vector<32x128xf32>
    %60 = arith.addf %54, %59 : vector<32x128xf32>
    %c31_i32_30 = arith.constant 31 : i32
    %61 = tpu.dynamic_rotate %48 by %c31_i32_30 dim 0 : vector<32x128xf32>, i32 -> vector<32x128xf32>
    %c2_31 = arith.constant 2 : index
    %c0_32 = arith.constant 0 : index
    %c0_33 = arith.constant 0 : index
    %62 = vector.load %arg4[%c2_31, %c0_32, %c0_33] : memref<3x128x128xf32, #tpu.memory_space<vmem>>, vector<1x128x128xf32>
    %63 = vector.shape_cast %62 : vector<1x128x128xf32> to vector<128x128xf32>
    %cst_34 = arith.constant dense<0.000000e+00> : vector<32x128xf32>
    %64 = tpu.matmul %61, %63, %cst_34 {dimension_numbers = #tpu.dot_dimension_numbers<[1], [0], [0], [1], [0, 0, 1, 1], [], []>} : vector<32x128xf32>, vector<128x128xf32>, vector<32x128xf32> -> vector<32x128xf32>
    %65 = arith.mulf %24, %64 : vector<32x128xf32>
    %66 = arith.addf %60, %65 : vector<32x128xf32>
    %cst_35 = arith.constant 0.000000e+00 : f32
    %67 = vector.broadcast %cst_35 : f32 to vector<32x128xf32>
    %68 = arith.cmpf oge, %66, %67 : vector<32x128xf32>
    %cst_36 = arith.constant 2.000000e-01 : f32
    %69 = vector.broadcast %cst_36 : f32 to vector<32x128xf32>
    %70 = arith.mulf %69, %66 : vector<32x128xf32>
    %71 = arith.select %68, %66, %70 : vector<32x128xi1>, vector<32x128xf32>
    %c1_37 = arith.constant 1 : index
    %c0_38 = arith.constant 0 : index
    %c0_39 = arith.constant 0 : index
    %72 = vector.load %arg6[%c1_37, %c0_38, %c0_39] : memref<3x128x128xf32, #tpu.memory_space<vmem>>, vector<1x128x128xf32>
    %73 = vector.shape_cast %72 : vector<1x128x128xf32> to vector<128x128xf32>
    %cst_40 = arith.constant dense<0.000000e+00> : vector<32x128xf32>
    %74 = tpu.matmul %71, %73, %cst_40 {dimension_numbers = #tpu.dot_dimension_numbers<[1], [0], [0], [1], [0, 0, 1, 1], [], []>} : vector<32x128xf32>, vector<128x128xf32>, vector<32x128xf32> -> vector<32x128xf32>
    %c0_41 = arith.constant 0 : index
    %c0_42 = arith.constant 0 : index
    %75 = vector.load %arg7[%c0_41, %c0_42] : memref<1x128xf32, #tpu.memory_space<vmem>>, vector<1x128xf32>
    %76 = vector.broadcast %75 : vector<1x128xf32> to vector<32x128xf32>
    %77 = arith.addf %74, %76 : vector<32x128xf32>
    %c1_i32_43 = arith.constant 1 : i32
    %78 = tpu.dynamic_rotate %71 by %c1_i32_43 dim 0 : vector<32x128xf32>, i32 -> vector<32x128xf32>
    %c0_44 = arith.constant 0 : index
    %c0_45 = arith.constant 0 : index
    %c0_46 = arith.constant 0 : index
    %79 = vector.load %arg6[%c0_44, %c0_45, %c0_46] : memref<3x128x128xf32, #tpu.memory_space<vmem>>, vector<1x128x128xf32>
    %80 = vector.shape_cast %79 : vector<1x128x128xf32> to vector<128x128xf32>
    %cst_47 = arith.constant dense<0.000000e+00> : vector<32x128xf32>
    %81 = tpu.matmul %78, %80, %cst_47 {dimension_numbers = #tpu.dot_dimension_numbers<[1], [0], [0], [1], [0, 0, 1, 1], [], []>} : vector<32x128xf32>, vector<128x128xf32>, vector<32x128xf32> -> vector<32x128xf32>
    %82 = arith.mulf %20, %81 : vector<32x128xf32>
    %83 = arith.addf %77, %82 : vector<32x128xf32>
    %c31_i32_48 = arith.constant 31 : i32
    %84 = tpu.dynamic_rotate %71 by %c31_i32_48 dim 0 : vector<32x128xf32>, i32 -> vector<32x128xf32>
    %c2_49 = arith.constant 2 : index
    %c0_50 = arith.constant 0 : index
    %c0_51 = arith.constant 0 : index
    %85 = vector.load %arg6[%c2_49, %c0_50, %c0_51] : memref<3x128x128xf32, #tpu.memory_space<vmem>>, vector<1x128x128xf32>
    %86 = vector.shape_cast %85 : vector<1x128x128xf32> to vector<128x128xf32>
    %cst_52 = arith.constant dense<0.000000e+00> : vector<32x128xf32>
    %87 = tpu.matmul %84, %86, %cst_52 {dimension_numbers = #tpu.dot_dimension_numbers<[1], [0], [0], [1], [0, 0, 1, 1], [], []>} : vector<32x128xf32>, vector<128x128xf32>, vector<32x128xf32> -> vector<32x128xf32>
    %88 = arith.mulf %24, %87 : vector<32x128xf32>
    %89 = arith.addf %83, %88 : vector<32x128xf32>
    %90 = arith.addf %48, %89 : vector<32x128xf32>
    %c1_53 = arith.constant 1 : index
    %c0_54 = arith.constant 0 : index
    %c0_55 = arith.constant 0 : index
    %91 = vector.load %arg8[%c1_53, %c0_54, %c0_55] : memref<3x128x128xf32, #tpu.memory_space<vmem>>, vector<1x128x128xf32>
    %92 = vector.shape_cast %91 : vector<1x128x128xf32> to vector<128x128xf32>
    %cst_56 = arith.constant dense<0.000000e+00> : vector<32x128xf32>
    %93 = tpu.matmul %90, %92, %cst_56 {dimension_numbers = #tpu.dot_dimension_numbers<[1], [0], [0], [1], [0, 0, 1, 1], [], []>} : vector<32x128xf32>, vector<128x128xf32>, vector<32x128xf32> -> vector<32x128xf32>
    %c0_57 = arith.constant 0 : index
    %c0_58 = arith.constant 0 : index
    %94 = vector.load %arg9[%c0_57, %c0_58] : memref<1x128xf32, #tpu.memory_space<vmem>>, vector<1x128xf32>
    %95 = vector.broadcast %94 : vector<1x128xf32> to vector<32x128xf32>
    %96 = arith.addf %93, %95 : vector<32x128xf32>
    %c1_i32_59 = arith.constant 1 : i32
    %97 = tpu.dynamic_rotate %90 by %c1_i32_59 dim 0 : vector<32x128xf32>, i32 -> vector<32x128xf32>
    %c0_60 = arith.constant 0 : index
    %c0_61 = arith.constant 0 : index
    %c0_62 = arith.constant 0 : index
    %98 = vector.load %arg8[%c0_60, %c0_61, %c0_62] : memref<3x128x128xf32, #tpu.memory_space<vmem>>, vector<1x128x128xf32>
    %99 = vector.shape_cast %98 : vector<1x128x128xf32> to vector<128x128xf32>
    %cst_63 = arith.constant dense<0.000000e+00> : vector<32x128xf32>
    %100 = tpu.matmul %97, %99, %cst_63 {dimension_numbers = #tpu.dot_dimension_numbers<[1], [0], [0], [1], [0, 0, 1, 1], [], []>} : vector<32x128xf32>, vector<128x128xf32>, vector<32x128xf32> -> vector<32x128xf32>
    %101 = arith.mulf %20, %100 : vector<32x128xf32>
    %102 = arith.addf %96, %101 : vector<32x128xf32>
    %c31_i32_64 = arith.constant 31 : i32
    %103 = tpu.dynamic_rotate %90 by %c31_i32_64 dim 0 : vector<32x128xf32>, i32 -> vector<32x128xf32>
    %c2_65 = arith.constant 2 : index
    %c0_66 = arith.constant 0 : index
    %c0_67 = arith.constant 0 : index
    %104 = vector.load %arg8[%c2_65, %c0_66, %c0_67] : memref<3x128x128xf32, #tpu.memory_space<vmem>>, vector<1x128x128xf32>
    %105 = vector.shape_cast %104 : vector<1x128x128xf32> to vector<128x128xf32>
    %cst_68 = arith.constant dense<0.000000e+00> : vector<32x128xf32>
    %106 = tpu.matmul %103, %105, %cst_68 {dimension_numbers = #tpu.dot_dimension_numbers<[1], [0], [0], [1], [0, 0, 1, 1], [], []>} : vector<32x128xf32>, vector<128x128xf32>, vector<32x128xf32> -> vector<32x128xf32>
    %107 = arith.mulf %24, %106 : vector<32x128xf32>
    %108 = arith.addf %102, %107 : vector<32x128xf32>
    %cst_69 = arith.constant 0.000000e+00 : f32
    %109 = vector.broadcast %cst_69 : f32 to vector<32x128xf32>
    %110 = arith.cmpf oge, %108, %109 : vector<32x128xf32>
    %cst_70 = arith.constant 2.000000e-01 : f32
    %111 = vector.broadcast %cst_70 : f32 to vector<32x128xf32>
    %112 = arith.mulf %111, %108 : vector<32x128xf32>
    %113 = arith.select %110, %108, %112 : vector<32x128xi1>, vector<32x128xf32>
    %c1_71 = arith.constant 1 : index
    %c0_72 = arith.constant 0 : index
    %c0_73 = arith.constant 0 : index
    %114 = vector.load %arg10[%c1_71, %c0_72, %c0_73] : memref<3x128x128xf32, #tpu.memory_space<vmem>>, vector<1x128x128xf32>
    %115 = vector.shape_cast %114 : vector<1x128x128xf32> to vector<128x128xf32>
    %cst_74 = arith.constant dense<0.000000e+00> : vector<32x128xf32>
    %116 = tpu.matmul %113, %115, %cst_74 {dimension_numbers = #tpu.dot_dimension_numbers<[1], [0], [0], [1], [0, 0, 1, 1], [], []>} : vector<32x128xf32>, vector<128x128xf32>, vector<32x128xf32> -> vector<32x128xf32>
    %c0_75 = arith.constant 0 : index
    %c0_76 = arith.constant 0 : index
    %117 = vector.load %arg11[%c0_75, %c0_76] : memref<1x128xf32, #tpu.memory_space<vmem>>, vector<1x128xf32>
    %118 = vector.broadcast %117 : vector<1x128xf32> to vector<32x128xf32>
    %119 = arith.addf %116, %118 : vector<32x128xf32>
    %c1_i32_77 = arith.constant 1 : i32
    %120 = tpu.dynamic_rotate %113 by %c1_i32_77 dim 0 : vector<32x128xf32>, i32 -> vector<32x128xf32>
    %c0_78 = arith.constant 0 : index
    %c0_79 = arith.constant 0 : index
    %c0_80 = arith.constant 0 : index
    %121 = vector.load %arg10[%c0_78, %c0_79, %c0_80] : memref<3x128x128xf32, #tpu.memory_space<vmem>>, vector<1x128x128xf32>
    %122 = vector.shape_cast %121 : vector<1x128x128xf32> to vector<128x128xf32>
    %cst_81 = arith.constant dense<0.000000e+00> : vector<32x128xf32>
    %123 = tpu.matmul %120, %122, %cst_81 {dimension_numbers = #tpu.dot_dimension_numbers<[1], [0], [0], [1], [0, 0, 1, 1], [], []>} : vector<32x128xf32>, vector<128x128xf32>, vector<32x128xf32> -> vector<32x128xf32>
    %124 = arith.mulf %20, %123 : vector<32x128xf32>
    %125 = arith.addf %119, %124 : vector<32x128xf32>
    %c31_i32_82 = arith.constant 31 : i32
    %126 = tpu.dynamic_rotate %113 by %c31_i32_82 dim 0 : vector<32x128xf32>, i32 -> vector<32x128xf32>
    %c2_83 = arith.constant 2 : index
    %c0_84 = arith.constant 0 : index
    %c0_85 = arith.constant 0 : index
    %127 = vector.load %arg10[%c2_83, %c0_84, %c0_85] : memref<3x128x128xf32, #tpu.memory_space<vmem>>, vector<1x128x128xf32>
    %128 = vector.shape_cast %127 : vector<1x128x128xf32> to vector<128x128xf32>
    %cst_86 = arith.constant dense<0.000000e+00> : vector<32x128xf32>
    %129 = tpu.matmul %126, %128, %cst_86 {dimension_numbers = #tpu.dot_dimension_numbers<[1], [0], [0], [1], [0, 0, 1, 1], [], []>} : vector<32x128xf32>, vector<128x128xf32>, vector<32x128xf32> -> vector<32x128xf32>
    %130 = arith.mulf %24, %129 : vector<32x128xf32>
    %131 = arith.addf %125, %130 : vector<32x128xf32>
    %cst_87 = arith.constant 0.000000e+00 : f32
    %132 = vector.broadcast %cst_87 : f32 to vector<32x128xf32>
    %133 = arith.cmpf oge, %131, %132 : vector<32x128xf32>
    %cst_88 = arith.constant 2.000000e-01 : f32
    %134 = vector.broadcast %cst_88 : f32 to vector<32x128xf32>
    %135 = arith.mulf %134, %131 : vector<32x128xf32>
    %136 = arith.select %133, %131, %135 : vector<32x128xi1>, vector<32x128xf32>
    %c1_89 = arith.constant 1 : index
    %c0_90 = arith.constant 0 : index
    %c0_91 = arith.constant 0 : index
    %137 = vector.load %arg12[%c1_89, %c0_90, %c0_91] : memref<3x128x128xf32, #tpu.memory_space<vmem>>, vector<1x128x128xf32>
    %138 = vector.shape_cast %137 : vector<1x128x128xf32> to vector<128x128xf32>
    %cst_92 = arith.constant dense<0.000000e+00> : vector<32x128xf32>
    %139 = tpu.matmul %136, %138, %cst_92 {dimension_numbers = #tpu.dot_dimension_numbers<[1], [0], [0], [1], [0, 0, 1, 1], [], []>} : vector<32x128xf32>, vector<128x128xf32>, vector<32x128xf32> -> vector<32x128xf32>
    %c0_93 = arith.constant 0 : index
    %c0_94 = arith.constant 0 : index
    %140 = vector.load %arg13[%c0_93, %c0_94] : memref<1x128xf32, #tpu.memory_space<vmem>>, vector<1x128xf32>
    %141 = vector.broadcast %140 : vector<1x128xf32> to vector<32x128xf32>
    %142 = arith.addf %139, %141 : vector<32x128xf32>
    %c1_i32_95 = arith.constant 1 : i32
    %143 = tpu.dynamic_rotate %136 by %c1_i32_95 dim 0 : vector<32x128xf32>, i32 -> vector<32x128xf32>
    %c0_96 = arith.constant 0 : index
    %c0_97 = arith.constant 0 : index
    %c0_98 = arith.constant 0 : index
    %144 = vector.load %arg12[%c0_96, %c0_97, %c0_98] : memref<3x128x128xf32, #tpu.memory_space<vmem>>, vector<1x128x128xf32>
    %145 = vector.shape_cast %144 : vector<1x128x128xf32> to vector<128x128xf32>
    %cst_99 = arith.constant dense<0.000000e+00> : vector<32x128xf32>
    %146 = tpu.matmul %143, %145, %cst_99 {dimension_numbers = #tpu.dot_dimension_numbers<[1], [0], [0], [1], [0, 0, 1, 1], [], []>} : vector<32x128xf32>, vector<128x128xf32>, vector<32x128xf32> -> vector<32x128xf32>
    %147 = arith.mulf %20, %146 : vector<32x128xf32>
    %148 = arith.addf %142, %147 : vector<32x128xf32>
    %c31_i32_100 = arith.constant 31 : i32
    %149 = tpu.dynamic_rotate %136 by %c31_i32_100 dim 0 : vector<32x128xf32>, i32 -> vector<32x128xf32>
    %c2_101 = arith.constant 2 : index
    %c0_102 = arith.constant 0 : index
    %c0_103 = arith.constant 0 : index
    %150 = vector.load %arg12[%c2_101, %c0_102, %c0_103] : memref<3x128x128xf32, #tpu.memory_space<vmem>>, vector<1x128x128xf32>
    %151 = vector.shape_cast %150 : vector<1x128x128xf32> to vector<128x128xf32>
    %cst_104 = arith.constant dense<0.000000e+00> : vector<32x128xf32>
    %152 = tpu.matmul %149, %151, %cst_104 {dimension_numbers = #tpu.dot_dimension_numbers<[1], [0], [0], [1], [0, 0, 1, 1], [], []>} : vector<32x128xf32>, vector<128x128xf32>, vector<32x128xf32> -> vector<32x128xf32>
    %153 = arith.mulf %24, %152 : vector<32x128xf32>
    %154 = arith.addf %148, %153 : vector<32x128xf32>
    %155 = arith.addf %113, %154 : vector<32x128xf32>
    %c0_105 = arith.constant 0 : index
    %c0_106 = arith.constant 0 : index
    %156 = vector.load %arg14[%c0_105, %c0_106] : memref<32x128xf32, #tpu.memory_space<vmem>>, vector<32x128xf32>
    tpu.vector_store %arg14[%c0_105, %c0_106], %155 {strides = array<i32>} : memref<32x128xf32, #tpu.memory_space<vmem>>, vector<32x128xf32>,
    return
  }
  func.func @transform_0(%arg0: i32) -> (i32, i32) {
    %c0_i32 = arith.constant 0 : i32
    %c0_i32_0 = arith.constant 0 : i32
    return %arg0, %c0_i32 : i32, i32
  }
  func.func @transform_1(%arg0: i32) -> (i32, i32, i32) {
    %c0_i32 = arith.constant 0 : i32
    %c0_i32_0 = arith.constant 0 : i32
    %c0_i32_1 = arith.constant 0 : i32
    %c0_i32_2 = arith.constant 0 : i32
    return %c0_i32, %c0_i32_0, %c0_i32_1 : i32, i32, i32
  }
  func.func @transform_2(%arg0: i32) -> (i32, i32) {
    %c0_i32 = arith.constant 0 : i32
    %c0_i32_0 = arith.constant 0 : i32
    %c0_i32_1 = arith.constant 0 : i32
    return %c0_i32, %c0_i32_0 : i32, i32
  }
  func.func @transform_3(%arg0: i32) -> (i32, i32, i32) {
    %c0_i32 = arith.constant 0 : i32
    %c0_i32_0 = arith.constant 0 : i32
    %c0_i32_1 = arith.constant 0 : i32
    %c0_i32_2 = arith.constant 0 : i32
    return %c0_i32, %c0_i32_0, %c0_i32_1 : i32, i32, i32
  }
  func.func @transform_4(%arg0: i32) -> (i32, i32) {
    %c0_i32 = arith.constant 0 : i32
    %c0_i32_0 = arith.constant 0 : i32
    %c0_i32_1 = arith.constant 0 : i32
    return %c0_i32, %c0_i32_0 : i32, i32
  }
  func.func @transform_5(%arg0: i32) -> (i32, i32, i32) {
    %c0_i32 = arith.constant 0 : i32
    %c0_i32_0 = arith.constant 0 : i32
    %c0_i32_1 = arith.constant 0 : i32
    %c0_i32_2 = arith.constant 0 : i32
    return %c0_i32, %c0_i32_0, %c0_i32_1 : i32, i32, i32
  }
  func.func @transform_6(%arg0: i32) -> (i32, i32) {
    %c0_i32 = arith.constant 0 : i32
    %c0_i32_0 = arith.constant 0 : i32
    %c0_i32_1 = arith.constant 0 : i32
    return %c0_i32, %c0_i32_0 : i32, i32
  }
  func.func @transform_7(%arg0: i32) -> (i32, i32, i32) {
    %c0_i32 = arith.constant 0 : i32
    %c0_i32_0 = arith.constant 0 : i32
    %c0_i32_1 = arith.constant 0 : i32
    %c0_i32_2 = arith.constant 0 : i32
    return %c0_i32, %c0_i32_0, %c0_i32_1 : i32, i32, i32
  }
  func.func @transform_8(%arg0: i32) -> (i32, i32) {
    %c0_i32 = arith.constant 0 : i32
    %c0_i32_0 = arith.constant 0 : i32
    %c0_i32_1 = arith.constant 0 : i32
    return %c0_i32, %c0_i32_0 : i32, i32
  }
  func.func @transform_9(%arg0: i32) -> (i32, i32, i32) {
    %c0_i32 = arith.constant 0 : i32
    %c0_i32_0 = arith.constant 0 : i32
    %c0_i32_1 = arith.constant 0 : i32
    %c0_i32_2 = arith.constant 0 : i32
    return %c0_i32, %c0_i32_0, %c0_i32_1 : i32, i32, i32
  }
  func.func @transform_10(%arg0: i32) -> (i32, i32) {
    %c0_i32 = arith.constant 0 : i32
    %c0_i32_0 = arith.constant 0 : i32
    %c0_i32_1 = arith.constant 0 : i32
    return %c0_i32, %c0_i32_0 : i32, i32
  }
  func.func @transform_11(%arg0: i32) -> (i32, i32, i32) {
    %c0_i32 = arith.constant 0 : i32
    %c0_i32_0 = arith.constant 0 : i32
    %c0_i32_1 = arith.constant 0 : i32
    %c0_i32_2 = arith.constant 0 : i32
    return %c0_i32, %c0_i32_0, %c0_i32_1 : i32, i32, i32
  }
  func.func @transform_12(%arg0: i32) -> (i32, i32) {
    %c0_i32 = arith.constant 0 : i32
    %c0_i32_0 = arith.constant 0 : i32
    %c0_i32_1 = arith.constant 0 : i32
    return %c0_i32, %c0_i32_0 : i32, i32
  }
  func.func @transform_13(%arg0: i32) -> (i32, i32) {
    %c0_i32 = arith.constant 0 : i32
    %c0_i32_0 = arith.constant 0 : i32
    return %arg0, %c0_i32 : i32, i32
  }
}

</mosaic_0001>

<llo_original>
// kernel: tpu_custom_call.1
$region0: #{tpu_custom_call.1}
  #allocation0 [shape = 'u32[]', space=smem, size = 0x4, offset = 0x4, fixed_abs, tag = 'smem constant byte address 0x4 - core index']
  #allocation1 [shape = 'u32[72,128]{1,0:T(1,128)}', space=vmem, size = 0x9000, scoped, tag = 'internal scratch']
  %s0 = inlined_call_operand.hbm [shape: f32[64,128], index: 0, kind: input, shape index: {}]
  %s1 = inlined_call_operand.hbm [shape: f32[3,128,128], index: 1, kind: input, shape index: {}]
  %s2 = inlined_call_operand.vmem [shape: f32[1,128], index: 2, kind: input, shape index: {}]
  %s3 = inlined_call_operand.hbm [shape: f32[3,128,128], index: 3, kind: input, shape index: {}]
  %s4 = inlined_call_operand.vmem [shape: f32[1,128], index: 4, kind: input, shape index: {}]
  %s5 = inlined_call_operand.hbm [shape: f32[3,128,128], index: 5, kind: input, shape index: {}]
  %s6 = inlined_call_operand.vmem [shape: f32[1,128], index: 6, kind: input, shape index: {}]
  %s7 = inlined_call_operand.hbm [shape: f32[3,128,128], index: 7, kind: input, shape index: {}]
  %s8 = inlined_call_operand.vmem [shape: f32[1,128], index: 8, kind: input, shape index: {}]
  %s9 = inlined_call_operand.hbm [shape: f32[3,128,128], index: 9, kind: input, shape index: {}]
  %s10 = inlined_call_operand.vmem [shape: f32[1,128], index: 10, kind: input, shape index: {}]
  %s11 = inlined_call_operand.hbm [shape: f32[3,128,128], index: 11, kind: input, shape index: {}]
  %s12 = inlined_call_operand.vmem [shape: f32[1,128], index: 12, kind: input, shape index: {}]
  %s13 = inlined_call_operand.hbm [shape: f32[64,128], index: 13, kind: output, shape index: {}]
  %s14 = sld [smem:[#allocation0]]
  $region113: #{tpu_custom_call.1} parent=0
    _
  %s16 = ssub.s32 1, %s14
  %s17 = scalar_select 0, %s16, %s14
  $region1: #{tpu_custom_call.1} parent=0
    #allocation2 [shape = 'u8[32768]{0}', space=vmem, size = 0x8000, scoped, tag = 'input window, operand 0']
    #allocation3 [shape = 's32[2]{0}', space=sflag, size = 0x8, scoped, tag = 'scoped memory for tpu_custom_call.1']
    #allocation4 [shape = 's32[2]{0}', space=sflag, size = 0x8, scoped, tag = 'scoped memory for tpu_custom_call.1']
    #allocation5 [shape = 'u8[196608]{0}', space=vmem, size = 0x30000, scoped, tag = 'input window, operand 1, single buffered']
    #allocation6 [shape = 's32[1]{0}', space=sflag, size = 0x4, scoped, tag = 'scoped memory for tpu_custom_call.1']
    #allocation7 [shape = 'u8[196608]{0}', space=vmem, size = 0x30000, scoped, tag = 'input window, operand 3, single buffered']
    #allocation8 [shape = 'u8[196608]{0}', space=vmem, size = 0x30000, scoped, tag = 'input window, operand 5, single buffered']
    #allocation9 [shape = 's32[1]{0}', space=sflag, size = 0x4, scoped, tag = 'scoped memory for tpu_custom_call.1']
    #allocation10 [shape = 'u8[196608]{0}', space=vmem, size = 0x30000, scoped, tag = 'input window, operand 7, single buffered']
    #allocation11 [shape = 'u8[196608]{0}', space=vmem, size = 0x30000, scoped, tag = 'input window, operand 9, single buffered']
    #allocation12 [shape = 's32[1]{0}', space=sflag, size = 0x4, scoped, tag = 'scoped memory for tpu_custom_call.1']
    #allocation13 [shape = 'u8[196608]{0}', space=vmem, size = 0x30000, scoped, tag = 'input window, operand 11, single buffered']
    #allocation14 [shape = 'u8[32768]{0}', space=vmem, size = 0x8000, scoped, tag = 'output window, operand 0']
    %18 = vsyncpa [#allocation3], 0
    %s19 = scalar_lea.sflag [#allocation3], 1
    %20 = vsyncpa %s19, 0
    %21 = vsyncpa [#allocation6], 0
    %22 = vsyncpa [#allocation9], 0
    %23 = vsyncpa [#allocation12], 0
    %24 = vsyncpa [#allocation4], 0
    %s25 = scalar_lea.sflag [#allocation4], 1
    %26 = vsyncpa %s25, 0
    loop: start=0, step=1, limit=4
    $region2: #{tpu_custom_call.1} parent=1 // loop_pre_header
      _
    $region3: #{tpu_custom_call.1} parent=1 // loop_header
      %s28 = sphi 0, %s32
      %p29 = scmp.ge.s32.totalorder %s28, 4
      %s38 = sphi 0, %s40
      %s41 = sphi 0, %s38
      %s42 = sphi 0, %s41
      %s58 = sphi 0, %s42
      %s62 = sphi 0, %s62
      %s64 = sphi 0, %s62
      %s65 = sphi 0, %s64
      %s79 = sphi 0, %s65
      %s83 = sphi 0, %s83
      %s85 = sphi 0, %s83
      %s86 = sphi 0, %s85
      %s100 = sphi 0, %s86
      %s104 = sphi 0, %s104
      %s106 = sphi 0, %s104
      %s107 = sphi 0, %s106
      %s121 = sphi 0, %s107
      %s125 = sphi 0, %s125
      %s127 = sphi 0, %s125
      %s128 = sphi 0, %s127
      %s142 = sphi 0, %s128
      %s146 = sphi 0, %s146
      %s148 = sphi 0, %s146
      %s149 = sphi 0, %s148
      %s163 = sphi 0, %s149
      %s167 = sphi 0, %s167
      %s169 = sphi 0, %s167
      %s170 = sphi 0, %s169
      %s184 = sphi 0, %s170
      %s188 = sphi 0, %s188
      %s190 = sphi 0, %s188
      %s191 = sphi 0, %s190
      %s205 = sphi 0, %s191
      %s209 = sphi 0, %s209
      %s211 = sphi 0, %s209
      %s212 = sphi 0, %s211
      %s226 = sphi 0, %s212
      %s230 = sphi 0, %s230
      %s232 = sphi 0, %s230
      %s233 = sphi 0, %s232
      %s247 = sphi 0, %s233
      %s251 = sphi 0, %s251
      %s253 = sphi 0, %s251
      %s254 = sphi 0, %s253
      %s268 = sphi 0, %s254
      %s272 = sphi 0, %s272
      %s274 = sphi 0, %s272
      %s275 = sphi 0, %s274
      %s289 = sphi 0, %s275
      %s293 = sphi 0, %s293
      %s295 = sphi 0, %s293
      %s296 = sphi 0, %s295
      %s310 = sphi 0, %s296
      %s316 = sphi 0, %s318
      %s319 = sphi 0, %s316
      %s320 = sphi 0, %s319
      %s336 = sphi 0, %s320
    $region4: #{tpu_custom_call.1} parent=1 // loop_header_branch
      %31 = sbr.rel (%p29) target = $region8
    $region5: #{tpu_custom_call.1} parent=1 // loop_body
      %s33 = ssub.s32 %s28, 1
      %s34 = ssub.s32 %s28, 2
      %s35 = sadd.s32 %s28, 1
      %s36 = ssub.s32 %s28, %s35
      %p37 = scmp.eq.s32.totalorder %s36, 0
      %s39 = sadd.s32 %s38, 1
      %s40 = scalar_select %p37, %s38, %s39
      %p43 = pneg %p37
      %p44 = scmp.eq.s32.totalorder %s28, 1
      %p45 = por %p43, %p44
      %p46 = scmp.ne.s32.totalorder %s38, %s41
      %p47 = scmp.eq.s32.totalorder %s28, 0
      %p48 = por %p46, %p47
      %p49 = scmp.ne.s32.totalorder %s38, %s41
      %p50 = scmp.eq.s32.totalorder %s33, 1
      %p51 = por %p49, %p50
      %p52 = scmp.ne.s32.totalorder %s41, %s42
      %p53 = scmp.eq.s32.totalorder %s33, 0
      %p54 = por %p52, %p53
      %p55 = scmp.ne.s32.totalorder %s41, %s42
      %p56 = scmp.eq.s32.totalorder %s34, 1
      %p57 = por %p55, %p56
      %p59 = scmp.ne.s32.totalorder %s42, %s58
      %p60 = scmp.eq.s32.totalorder %s34, 0
      %p61 = por %p59, %p60
      %s63 = sadd.s32 %s62, 1
      %p66 = scmp.eq.s32.totalorder %s28, 1
      %p67 = scmp.ne.s32.totalorder %s62, %s64
      %p68 = scmp.eq.s32.totalorder %s28, 0
      %p69 = por %p67, %p68
      %p70 = scmp.ne.s32.totalorder %s62, %s64
      %p71 = scmp.eq.s32.totalorder %s33, 1
      %p72 = por %p70, %p71
      %p73 = scmp.ne.s32.totalorder %s64, %s65
      %p74 = scmp.eq.s32.totalorder %s33, 0
      %p75 = por %p73, %p74
      %p76 = scmp.ne.s32.totalorder %s64, %s65
      %p77 = scmp.eq.s32.totalorder %s34, 1
      %p78 = por %p76, %p77
      %p80 = scmp.ne.s32.totalorder %s65, %s79
      %p81 = scmp.eq.s32.totalorder %s34, 0
      %p82 = por %p80, %p81
      %s84 = sadd.s32 %s83, 1
      %p87 = scmp.eq.s32.totalorder %s28, 1
      %p88 = scmp.ne.s32.totalorder %s83, %s85
      %p89 = scmp.eq.s32.totalorder %s28, 0
      %p90 = por %p88, %p89
      %p91 = scmp.ne.s32.totalorder %s83, %s85
      %p92 = scmp.eq.s32.totalorder %s33, 1
      %p93 = por %p91, %p92
      %p94 = scmp.ne.s32.totalorder %s85, %s86
      %p95 = scmp.eq.s32.totalorder %s33, 0
      %p96 = por %p94, %p95
      %p97 = scmp.ne.s32.totalorder %s85, %s86
      %p98 = scmp.eq.s32.totalorder %s34, 1
      %p99 = por %p97, %p98
      %p101 = scmp.ne.s32.totalorder %s86, %s100
      %p102 = scmp.eq.s32.totalorder %s34, 0
      %p103 = por %p101, %p102
      %s105 = sadd.s32 %s104, 1
      %p108 = scmp.eq.s32.totalorder %s28, 1
      %p109 = scmp.ne.s32.totalorder %s104, %s106
      %p110 = scmp.eq.s32.totalorder %s28, 0
      %p111 = por %p109, %p110
      %p112 = scmp.ne.s32.totalorder %s104, %s106
      %p113 = scmp.eq.s32.totalorder %s33, 1
      %p114 = por %p112, %p113
      %p115 = scmp.ne.s32.totalorder %s106, %s107
      %p116 = scmp.eq.s32.totalorder %s33, 0
      %p117 = por %p115, %p116
      %p118 = scmp.ne.s32.totalorder %s106, %s107
      %p119 = scmp.eq.s32.totalorder %s34, 1
      %p120 = por %p118, %p119
      %p122 = scmp.ne.s32.totalorder %s107, %s121
      %p123 = scmp.eq.s32.totalorder %s34, 0
      %p124 = por %p122, %p123
      %s126 = sadd.s32 %s125, 1
      %p129 = scmp.eq.s32.totalorder %s28, 1
      %p130 = scmp.ne.s32.totalorder %s125, %s127
      %p131 = scmp.eq.s32.totalorder %s28, 0
      %p132 = por %p130, %p131
      %p133 = scmp.ne.s32.totalorder %s125, %s127
      %p134 = scmp.eq.s32.totalorder %s33, 1
      %p135 = por %p133, %p134
      %p136 = scmp.ne.s32.totalorder %s127, %s128
      %p137 = scmp.eq.s32.totalorder %s33, 0
      %p138 = por %p136, %p137
      %p139 = scmp.ne.s32.totalorder %s127, %s128
      %p140 = scmp.eq.s32.totalorder %s34, 1
      %p141 = por %p139, %p140
      %p143 = scmp.ne.s32.totalorder %s128, %s142
      %p144 = scmp.eq.s32.totalorder %s34, 0
      %p145 = por %p143, %p144
      %s147 = sadd.s32 %s146, 1
      %p150 = scmp.eq.s32.totalorder %s28, 1
      %p151 = scmp.ne.s32.totalorder %s146, %s148
      %p152 = scmp.eq.s32.totalorder %s28, 0
      %p153 = por %p151, %p152
      %p154 = scmp.ne.s32.totalorder %s146, %s148
      %p155 = scmp.eq.s32.totalorder %s33, 1
      %p156 = por %p154, %p155
      %p157 = scmp.ne.s32.totalorder %s148, %s149
      %p158 = scmp.eq.s32.totalorder %s33, 0
      %p159 = por %p157, %p158
      %p160 = scmp.ne.s32.totalorder %s148, %s149
      %p161 = scmp.eq.s32.totalorder %s34, 1
      %p162 = por %p160, %p161
      %p164 = scmp.ne.s32.totalorder %s149, %s163
      %p165 = scmp.eq.s32.totalorder %s34, 0
      %p166 = por %p164, %p165
      %s168 = sadd.s32 %s167, 1
      %p171 = scmp.eq.s32.totalorder %s28, 1
      %p172 = scmp.ne.s32.totalorder %s167, %s169
      %p173 = scmp.eq.s32.totalorder %s28, 0
      %p174 = por %p172, %p173
      %p175 = scmp.ne.s32.totalorder %s167, %s169
      %p176 = scmp.eq.s32.totalorder %s33, 1
      %p177 = por %p175, %p176
      %p178 = scmp.ne.s32.totalorder %s169, %s170
      %p179 = scmp.eq.s32.totalorder %s33, 0
      %p180 = por %p178, %p179
      %p181 = scmp.ne.s32.totalorder %s169, %s170
      %p182 = scmp.eq.s32.totalorder %s34, 1
      %p183 = por %p181, %p182
      %p185 = scmp.ne.s32.totalorder %s170, %s184
      %p186 = scmp.eq.s32.totalorder %s34, 0
      %p187 = por %p185, %p186
      %s189 = sadd.s32 %s188, 1
      %p192 = scmp.eq.s32.totalorder %s28, 1
      %p193 = scmp.ne.s32.totalorder %s188, %s190
      %p194 = scmp.eq.s32.totalorder %s28, 0
      %p195 = por %p193, %p194
      %p196 = scmp.ne.s32.totalorder %s188, %s190
      %p197 = scmp.eq.s32.totalorder %s33, 1
      %p198 = por %p196, %p197
      %p199 = scmp.ne.s32.totalorder %s190, %s191
      %p200 = scmp.eq.s32.totalorder %s33, 0
      %p201 = por %p199, %p200
      %p202 = scmp.ne.s32.totalorder %s190, %s191
      %p203 = scmp.eq.s32.totalorder %s34, 1
      %p204 = por %p202, %p203
      %p206 = scmp.ne.s32.totalorder %s191, %s205
      %p207 = scmp.eq.s32.totalorder %s34, 0
      %p208 = por %p206, %p207
      %s210 = sadd.s32 %s209, 1
      %p213 = scmp.eq.s32.totalorder %s28, 1
      %p214 = scmp.ne.s32.totalorder %s209, %s211
      %p215 = scmp.eq.s32.totalorder %s28, 0
      %p216 = por %p214, %p215
      %p217 = scmp.ne.s32.totalorder %s209, %s211
      %p218 = scmp.eq.s32.totalorder %s33, 1
      %p219 = por %p217, %p218
      %p220 = scmp.ne.s32.totalorder %s211, %s212
      %p221 = scmp.eq.s32.totalorder %s33, 0
      %p222 = por %p220, %p221
      %p223 = scmp.ne.s32.totalorder %s211, %s212
      %p224 = scmp.eq.s32.totalorder %s34, 1
      %p225 = por %p223, %p224
      %p227 = scmp.ne.s32.totalorder %s212, %s226
      %p228 = scmp.eq.s32.totalorder %s34, 0
      %p229 = por %p227, %p228
      %s231 = sadd.s32 %s230, 1
      %p234 = scmp.eq.s32.totalorder %s28, 1
      %p235 = scmp.ne.s32.totalorder %s230, %s232
      %p236 = scmp.eq.s32.totalorder %s28, 0
      %p237 = por %p235, %p236
      %p238 = scmp.ne.s32.totalorder %s230, %s232
      %p239 = scmp.eq.s32.totalorder %s33, 1
      %p240 = por %p238, %p239
      %p241 = scmp.ne.s32.totalorder %s232, %s233
      %p242 = scmp.eq.s32.totalorder %s33, 0
      %p243 = por %p241, %p242
      %p244 = scmp.ne.s32.totalorder %s232, %s233
      %p245 = scmp.eq.s32.totalorder %s34, 1
      %p246 = por %p244, %p245
      %p248 = scmp.ne.s32.totalorder %s233, %s247
      %p249 = scmp.eq.s32.totalorder %s34, 0
      %p250 = por %p248, %p249
      %s252 = sadd.s32 %s251, 1
      %p255 = scmp.eq.s32.totalorder %s28, 1
      %p256 = scmp.ne.s32.totalorder %s251, %s253
      %p257 = scmp.eq.s32.totalorder %s28, 0
      %p258 = por %p256, %p257
      %p259 = scmp.ne.s32.totalorder %s251, %s253
      %p260 = scmp.eq.s32.totalorder %s33, 1
      %p261 = por %p259, %p260
      %p262 = scmp.ne.s32.totalorder %s253, %s254
      %p263 = scmp.eq.s32.totalorder %s33, 0
      %p264 = por %p262, %p263
      %p265 = scmp.ne.s32.totalorder %s253, %s254
      %p266 = scmp.eq.s32.totalorder %s34, 1
      %p267 = por %p265, %p266
      %p269 = scmp.ne.s32.totalorder %s254, %s268
      %p270 = scmp.eq.s32.totalorder %s34, 0
      %p271 = por %p269, %p270
      %s273 = sadd.s32 %s272, 1
      %p276 = scmp.eq.s32.totalorder %s28, 1
      %p277 = scmp.ne.s32.totalorder %s272, %s274
      %p278 = scmp.eq.s32.totalorder %s28, 0
      %p279 = por %p277, %p278
      %p280 = scmp.ne.s32.totalorder %s272, %s274
      %p281 = scmp.eq.s32.totalorder %s33, 1
      %p282 = por %p280, %p281
      %p283 = scmp.ne.s32.totalorder %s274, %s275
      %p284 = scmp.eq.s32.totalorder %s33, 0
      %p285 = por %p283, %p284
      %p286 = scmp.ne.s32.totalorder %s274, %s275
      %p287 = scmp.eq.s32.totalorder %s34, 1
      %p288 = por %p286, %p287
      %p290 = scmp.ne.s32.totalorder %s275, %s289
      %p291 = scmp.eq.s32.totalorder %s34, 0
      %p292 = por %p290, %p291
      %s294 = sadd.s32 %s293, 1
      %p297 = scmp.eq.s32.totalorder %s28, 1
      %p298 = scmp.ne.s32.totalorder %s293, %s295
      %p299 = scmp.eq.s32.totalorder %s28, 0
      %p300 = por %p298, %p299
      %p301 = scmp.ne.s32.totalorder %s293, %s295
      %p302 = scmp.eq.s32.totalorder %s33, 1
      %p303 = por %p301, %p302
      %p304 = scmp.ne.s32.totalorder %s295, %s296
      %p305 = scmp.eq.s32.totalorder %s33, 0
      %p306 = por %p304, %p305
      %p307 = scmp.ne.s32.totalorder %s295, %s296
      %p308 = scmp.eq.s32.totalorder %s34, 1
      %p309 = por %p307, %p308
      %p311 = scmp.ne.s32.totalorder %s296, %s310
      %p312 = scmp.eq.s32.totalorder %s34, 0
      %p313 = por %p311, %p312
      %s314 = ssub.s32 %s28, %s35
      %p315 = scmp.eq.s32.totalorder %s314, 0
      %s317 = sadd.s32 %s316, 1
      %s318 = scalar_select %p315, %s316, %s317
      %p321 = pneg %p315
      %p322 = scmp.eq.s32.totalorder %s28, 1
      %p323 = por %p321, %p322
      %p324 = scmp.ne.s32.totalorder %s316, %s319
      %p325 = scmp.eq.s32.totalorder %s28, 0
      %p326 = por %p324, %p325
      %p327 = scmp.ne.s32.totalorder %s316, %s319
      %p328 = scmp.eq.s32.totalorder %s33, 1
      %p329 = por %p327, %p328
      %p330 = scmp.ne.s32.totalorder %s319, %s320
      %p331 = scmp.eq.s32.totalorder %s33, 0
      %p332 = por %p330, %p331
      %p333 = scmp.ne.s32.totalorder %s319, %s320
      %p334 = scmp.eq.s32.totalorder %s34, 1
      %p335 = por %p333, %p334
      %p337 = scmp.ne.s32.totalorder %s320, %s336
      %p338 = scmp.eq.s32.totalorder %s34, 0
      %p339 = por %p337, %p338
      %p340 = scmp.le.s32.totalorder 1, %s28
      %p341 = scmp.lt.s32.totalorder %s28, 3
      %p342 = pnand %p340, %p341
      %p343 = pneg %p342
      // Predicated region
      $region9: #{tpu_custom_call.1} parent=5 // pred_check
        _
      $region10: #{tpu_custom_call.1} parent=5 // pred_check_branch
        %345 = sbr.rel (%p342) target = $region12
      $region11: #{tpu_custom_call.1} parent=5 // pred_region
        %s346 = ssub.s32 %s28, 1
        // Predicated region
        $region13: #{tpu_custom_call.1} parent=11 // pred_check
          %p347 = pneg %p75
        $region14: #{tpu_custom_call.1} parent=11 // pred_check_branch
          %349 = sbr.rel (%p347) target = $region16
        $region15: #{tpu_custom_call.1} parent=11 // pred_region
          %351 = vsyncadd [#allocation6], 0
          %s352 = sshll.u32 %s1, 4
          %s353 = int_to_ptr.hbm [resolvable:$true] %s352
          %s354 = sshll.u32 [#allocation5], 4
          %s355 = int_to_ptr.vmem [resolvable:$true] %s354
          %360 = dma.hbm_to_vmem [thread:$0]  %s353, 6144, %s355, [#allocation6], 128, 128, 8
        $region16: #{tpu_custom_call.1} parent=11 // pred_fallthru
          _
        // Predicated region
        $region17: #{tpu_custom_call.1} parent=11 // pred_check
          %p361 = pneg %p96
        $region18: #{tpu_custom_call.1} parent=11 // pred_check_branch
          %363 = sbr.rel (%p361) target = $region20
        $region19: #{tpu_custom_call.1} parent=11 // pred_region
          _
        $region20: #{tpu_custom_call.1} parent=11 // pred_fallthru
          _
        // Predicated region
        $region21: #{tpu_custom_call.1} parent=11 // pred_check
          %p364 = pneg %p117
        $region22: #{tpu_custom_call.1} parent=11 // pred_check_branch
          %366 = sbr.rel (%p364) target = $region24
        $region23: #{tpu_custom_call.1} parent=11 // pred_region
          %368 = vsyncadd [#allocation6], 0
          %s369 = sshll.u32 %s3, 4
          %s370 = int_to_ptr.hbm [resolvable:$true] %s369
          %s371 = sshll.u32 [#allocation7], 4
          %s372 = int_to_ptr.vmem [resolvable:$true] %s371
          %377 = dma.hbm_to_vmem [thread:$0]  %s370, 6144, %s372, [#allocation6], 128, 128, 8
        $region24: #{tpu_custom_call.1} parent=11 // pred_fallthru
          _
        // Predicated region
        $region25: #{tpu_custom_call.1} parent=11 // pred_check
          %p378 = pneg %p138
        $region26: #{tpu_custom_call.1} parent=11 // pred_check_branch
          %380 = sbr.rel (%p378) target = $region28
        $region27: #{tpu_custom_call.1} parent=11 // pred_region
          _
        $region28: #{tpu_custom_call.1} parent=11 // pred_fallthru
          _
        // Predicated region
        $region29: #{tpu_custom_call.1} parent=11 // pred_check
          %p381 = pneg %p159
        $region30: #{tpu_custom_call.1} parent=11 // pred_check_branch
          %383 = sbr.rel (%p381) target = $region32
        $region31: #{tpu_custom_call.1} parent=11 // pred_region
          %385 = vsyncadd [#allocation9], 0
          %s386 = sshll.u32 %s5, 4
          %s387 = int_to_ptr.hbm [resolvable:$true] %s386
          %s388 = sshll.u32 [#allocation8], 4
          %s389 = int_to_ptr.vmem [resolvable:$true] %s388
          %394 = dma.hbm_to_vmem [thread:$0]  %s387, 6144, %s389, [#allocation9], 128, 128, 8
        $region32: #{tpu_custom_call.1} parent=11 // pred_fallthru
          _
        // Predicated region
        $region33: #{tpu_custom_call.1} parent=11 // pred_check
          %p395 = pneg %p180
        $region34: #{tpu_custom_call.1} parent=11 // pred_check_branch
          %397 = sbr.rel (%p395) target = $region36
        $region35: #{tpu_custom_call.1} parent=11 // pred_region
          _
        $region36: #{tpu_custom_call.1} parent=11 // pred_fallthru
          _
        // Predicated region
        $region37: #{tpu_custom_call.1} parent=11 // pred_check
          %p398 = pneg %p201
        $region38: #{tpu_custom_call.1} parent=11 // pred_check_branch
          %400 = sbr.rel (%p398) target = $region40
        $region39: #{tpu_custom_call.1} parent=11 // pred_region
          %402 = vsyncadd [#allocation9], 0
          %s403 = sshll.u32 %s7, 4
          %s404 = int_to_ptr.hbm [resolvable:$true] %s403
          %s405 = sshll.u32 [#allocation10], 4
          %s406 = int_to_ptr.vmem [resolvable:$true] %s405
          %411 = dma.hbm_to_vmem [thread:$0]  %s404, 6144, %s406, [#allocation9], 128, 128, 8
        $region40: #{tpu_custom_call.1} parent=11 // pred_fallthru
          _
        // Predicated region
        $region41: #{tpu_custom_call.1} parent=11 // pred_check
          %p412 = pneg %p222
        $region42: #{tpu_custom_call.1} parent=11 // pred_check_branch
          %414 = sbr.rel (%p412) target = $region44
        $region43: #{tpu_custom_call.1} parent=11 // pred_region
          _
        $region44: #{tpu_custom_call.1} parent=11 // pred_fallthru
          _
        // Predicated region
        $region45: #{tpu_custom_call.1} parent=11 // pred_check
          %p415 = pneg %p243
        $region46: #{tpu_custom_call.1} parent=11 // pred_check_branch
          %417 = sbr.rel (%p415) target = $region48
        $region47: #{tpu_custom_call.1} parent=11 // pred_region
          %419 = vsyncadd [#allocation12], 0
          %s420 = sshll.u32 %s9, 4
          %s421 = int_to_ptr.hbm [resolvable:$true] %s420
          %s422 = sshll.u32 [#allocation11], 4
          %s423 = int_to_ptr.vmem [resolvable:$true] %s422
          %428 = dma.hbm_to_vmem [thread:$0]  %s421, 6144, %s423, [#allocation12], 128, 128, 8
        $region48: #{tpu_custom_call.1} parent=11 // pred_fallthru
          _
        // Predicated region
        $region49: #{tpu_custom_call.1} parent=11 // pred_check
          %p429 = pneg %p264
        $region50: #{tpu_custom_call.1} parent=11 // pred_check_branch
          %431 = sbr.rel (%p429) target = $region52
        $region51: #{tpu_custom_call.1} parent=11 // pred_region
          _
        $region52: #{tpu_custom_call.1} parent=11 // pred_fallthru
          _
        // Predicated region
        $region53: #{tpu_custom_call.1} parent=11 // pred_check
          %p432 = pneg %p285
        $region54: #{tpu_custom_call.1} parent=11 // pred_check_branch
          %434 = sbr.rel (%p432) target = $region56
        $region55: #{tpu_custom_call.1} parent=11 // pred_region
          %436 = vsyncadd [#allocation12], 0
          %s437 = sshll.u32 %s11, 4
          %s438 = int_to_ptr.hbm [resolvable:$true] %s437
          %s439 = sshll.u32 [#allocation13], 4
          %s440 = int_to_ptr.vmem [resolvable:$true] %s439
          %445 = dma.hbm_to_vmem [thread:$0]  %s438, 6144, %s440, [#allocation12], 128, 128, 8
        $region56: #{tpu_custom_call.1} parent=11 // pred_fallthru
          _
        // Predicated region
        $region57: #{tpu_custom_call.1} parent=11 // pred_check
          %p446 = pneg %p306
        $region58: #{tpu_custom_call.1} parent=11 // pred_check_branch
          %448 = sbr.rel (%p446) target = $region60
        $region59: #{tpu_custom_call.1} parent=11 // pred_region
          _
        $region60: #{tpu_custom_call.1} parent=11 // pred_fallthru
          _
      $region12: #{tpu_custom_call.1} parent=5 // pred_fallthru
        _
      %p449 = scmp.lt.s32.totalorder %s28, 2
      // Predicated region
      $region61: #{tpu_custom_call.1} parent=5 // pred_check
        %p450 = pneg %p449
      $region62: #{tpu_custom_call.1} parent=5 // pred_check_branch
        %452 = sbr.rel (%p450) target = $region64
      $region63: #{tpu_custom_call.1} parent=5 // pred_region
        // Predicated region
        $region65: #{tpu_custom_call.1} parent=63 // pred_check
          %p453 = pneg %p48
        $region66: #{tpu_custom_call.1} parent=63 // pred_check_branch
          %455 = sbr.rel (%p453) target = $region68
        $region67: #{tpu_custom_call.1} parent=63 // pred_region
          %s456 = sand.u32 %s38, 1
          %s457 = scalar_lea.sflag [#allocation3], %s456
          %s458 = sand.u32 %s38, 1
          %s459 = smul.addr %s458, 32
          %s460 = scalar_lea.vmem [#allocation2], %s459
          %s461 = smul.u32 4, %s28
          %463 = vsyncadd %s457, 0
          %s464 = smul.addr %s461, 8
          %s465 = scalar_lea.hbm %s0, %s464
          %s466 = sshll.u32 %s465, 4
          %s467 = int_to_ptr.hbm [resolvable:$true] %s466
          %s468 = sshll.u32 %s460, 4
          %s469 = int_to_ptr.vmem [resolvable:$true] %s468
          %474 = dma.hbm_to_vmem [thread:$0]  %s467, 512, %s469, %s457, 128, 128, 8
        $region68: #{tpu_custom_call.1} parent=63 // pred_fallthru
          _
      $region64: #{tpu_custom_call.1} parent=5 // pred_fallthru
        _
      %p475 = scmp.le.s32.totalorder 1, %s28
      %p476 = scmp.lt.s32.totalorder %s28, 3
      %p477 = pnand %p475, %p476
      %p478 = pneg %p477
      // Predicated region
      $region69: #{tpu_custom_call.1} parent=5 // pred_check
        _
      $region70: #{tpu_custom_call.1} parent=5 // pred_check_branch
        %480 = sbr.rel (%p477) target = $region72
      $region71: #{tpu_custom_call.1} parent=5 // pred_region
        %s481 = ssub.s32 %s28, 1
        %s482 = sand.u32 %s41, 1
        %s483 = scalar_lea.sflag [#allocation3], %s482
        %s484 = sand.u32 %s41, 1
        %s485 = smul.addr %s484, 32
        %s486 = scalar_lea.vmem [#allocation2], %s485
        // Predicated region
        $region73: #{tpu_custom_call.1} parent=71 // pred_check
          %p487 = pneg %p54
        $region74: #{tpu_custom_call.1} parent=71 // pred_check_branch
          %489 = sbr.rel (%p487) target = $region76
        $region75: #{tpu_custom_call.1} parent=71 // pred_region
          %491 = dma.done %s483, 512
        $region76: #{tpu_custom_call.1} parent=71 // pred_fallthru
          _
        // Predicated region
        $region77: #{tpu_custom_call.1} parent=71 // pred_check
          %p492 = pneg %p75
        $region78: #{tpu_custom_call.1} parent=71 // pred_check_branch
          %494 = sbr.rel (%p492) target = $region80
        $region79: #{tpu_custom_call.1} parent=71 // pred_region
          %496 = dma.done [#allocation6], 6144
        $region80: #{tpu_custom_call.1} parent=71 // pred_fallthru
          _
        // Predicated region
        $region81: #{tpu_custom_call.1} parent=71 // pred_check
          %p497 = pneg %p117
        $region82: #{tpu_custom_call.1} parent=71 // pred_check_branch
          %499 = sbr.rel (%p497) target = $region84
        $region83: #{tpu_custom_call.1} parent=71 // pred_region
          %501 = dma.done [#allocation6], 6144
        $region84: #{tpu_custom_call.1} parent=71 // pred_fallthru
          _
        // Predicated region
        $region85: #{tpu_custom_call.1} parent=71 // pred_check
          %p502 = pneg %p159
        $region86: #{tpu_custom_call.1} parent=71 // pred_check_branch
          %504 = sbr.rel (%p502) target = $region88
        $region87: #{tpu_custom_call.1} parent=71 // pred_region
          %506 = dma.done [#allocation9], 6144
        $region88: #{tpu_custom_call.1} parent=71 // pred_fallthru
          _
        // Predicated region
        $region89: #{tpu_custom_call.1} parent=71 // pred_check
          %p507 = pneg %p201
        $region90: #{tpu_custom_call.1} parent=71 // pred_check_branch
          %509 = sbr.rel (%p507) target = $region92
        $region91: #{tpu_custom_call.1} parent=71 // pred_region
          %511 = dma.done [#allocation9], 6144
        $region92: #{tpu_custom_call.1} parent=71 // pred_fallthru
          _
        // Predicated region
        $region93: #{tpu_custom_call.1} parent=71 // pred_check
          %p512 = pneg %p243
        $region94: #{tpu_custom_call.1} parent=71 // pred_check_branch
          %514 = sbr.rel (%p512) target = $region96
        $region95: #{tpu_custom_call.1} parent=71 // pred_region
          %516 = dma.done [#allocation12], 6144
        $region96: #{tpu_custom_call.1} parent=71 // pred_fallthru
          _
        // Predicated region
        $region97: #{tpu_custom_call.1} parent=71 // pred_check
          %p517 = pneg %p285
        $region98: #{tpu_custom_call.1} parent=71 // pred_check_branch
          %519 = sbr.rel (%p517) target = $region100
        $region99: #{tpu_custom_call.1} parent=71 // pred_region
          %521 = dma.done [#allocation12], 6144
        $region100: #{tpu_custom_call.1} parent=71 // pred_fallthru
          _
        %s522 = sand.u32 %s41, 1
        %s523 = scalar_lea.sflag [#allocation3], %s522
        %s524 = sand.u32 %s41, 1
        %s525 = smul.addr %s524, 32
        %s526 = scalar_lea.vmem [#allocation2], %s525
        %p527 = pneg %p54
        %p528 = pneg %p51
        %p529 = pneg %p75
        %p530 = pneg %p72
        %p531 = pneg %p96
        %p532 = pneg %p93
        %p533 = pneg %p117
        %p534 = pneg %p114
        %p535 = pneg %p138
        %p536 = pneg %p135
        %p537 = pneg %p159
        %p538 = pneg %p156
        %p539 = pneg %p180
        %p540 = pneg %p177
        %p541 = pneg %p201
        %p542 = pneg %p198
        %p543 = pneg %p222
        %p544 = pneg %p219
        %p545 = pneg %p243
        %p546 = pneg %p240
        %p547 = pneg %p264
        %p548 = pneg %p261
        %p549 = pneg %p285
        %p550 = pneg %p282
        %p551 = pneg %p306
        %p552 = pneg %p303
        %p553 = pneg %p332
        %p554 = pneg %p329
        %s555 = sand.u32 %s319, 1
        %s556 = scalar_lea.sflag [#allocation4], %s555
        %s557 = sand.u32 %s319, 1
        %s558 = smul.addr %s557, 32
        %s559 = scalar_lea.vmem [#allocation14], %s558
        %s560 = smul.u32 4, %s33
        %s561 = smul.u32 4, %s33
        %v562 = vlaneseq
        %v563 = vshrl.u32 %v562, 7
        %v564 = vadd.s32 %v563, 8
        %v565 = vadd.s32 %v563, 16
        %v566 = vadd.s32 %v563, 24
        %vm567 = vcmp.lt.s32.totalorder %v563, 0
        %v568 = vsub.s32 0, %v563
        %v569 = vsel %vm567, %v568, %v563
        %v570 = vshrl.u32 %v569, 4
        %v571 = vand.u32 %v569, 15
        %v572 = vsub.s32 0, %v571
        %v573 = vsel %vm567, %v572, %v571
        %vm574 = vcmp.lt.s32.totalorder %v564, 0
        %v575 = vsub.s32 0, %v564
        %v576 = vsel %vm574, %v575, %v564
        %v577 = vshrl.u32 %v576, 4
        %v578 = vand.u32 %v576, 15
        %v579 = vsub.s32 0, %v578
        %v580 = vsel %vm574, %v579, %v578
        %vm581 = vcmp.lt.s32.totalorder %v565, 0
        %v582 = vsub.s32 0, %v565
        %v583 = vsel %vm581, %v582, %v565
        %v584 = vshrl.u32 %v583, 4
        %v585 = vand.u32 %v583, 15
        %v586 = vsub.s32 0, %v585
        %v587 = vsel %vm581, %v586, %v585
        %vm588 = vcmp.lt.s32.totalorder %v566, 0
        %v589 = vsub.s32 0, %v566
        %v590 = vsel %vm588, %v589, %v566
        %v591 = vshrl.u32 %v590, 4
        %v592 = vand.u32 %v590, 15
        %v593 = vsub.s32 0, %v592
        %v594 = vsel %vm588, %v593, %v592
        %vm595 = vcmp.ne.s32.totalorder %v573, 0
        %vm596 = vcmp.ne.s32.totalorder %v580, 0
        %vm597 = vcmp.ne.s32.totalorder %v587, 0
        %vm598 = vcmp.ne.s32.totalorder %v594, 0
        %vm599 = vcmp.lt.s32.totalorder %v573, 0
        %vm600 = vcmp.lt.s32.totalorder %v580, 0
        %vm601 = vcmp.lt.s32.totalorder %v587, 0
        %vm602 = vcmp.lt.s32.totalorder %v594, 0
        %vm603 = vmand %vm599, %vm595
        %vm604 = vmand %vm600, %vm596
        %vm605 = vmand %vm601, %vm597
        %vm606 = vmand %vm602, %vm598
        %v607 = vadd.s32 %v573, 16
        %v608 = vadd.s32 %v580, 16
        %v609 = vadd.s32 %v587, 16
        %v610 = vadd.s32 %v594, 16
        %v611 = vsel %vm603, %v607, %v573
        %v612 = vsel %vm604, %v608, %v580
        %v613 = vsel %vm605, %v609, %v587
        %v614 = vsel %vm606, %v610, %v594
        %vm615 = vcmp.gt.s32.totalorder %v611, 0
        %vm616 = vcmp.gt.s32.totalorder %v612, 0
        %vm617 = vcmp.gt.s32.totalorder %v613, 0
        %vm618 = vcmp.gt.s32.totalorder %v614, 0
        %v619 = vsel %vm615, 1, 0
        %v620 = vsel %vm616, 1, 0
        %v621 = vsel %vm617, 1, 0
        %v622 = vsel %vm618, 1, 0
        %v623 = vcvt.s32.f32 %v619
        %v624 = vcvt.s32.f32 %v620
        %v625 = vcvt.s32.f32 %v621
        %v626 = vcvt.s32.f32 %v622
        %vm627 = vcmp.lt.s32.totalorder %v611, 15
        %vm628 = vcmp.lt.s32.totalorder %v612, 15
        %vm629 = vcmp.lt.s32.totalorder %v613, 15
        %vm630 = vcmp.lt.s32.totalorder %v614, 15
        %v631 = vsel %vm627, 1, 0
        %v632 = vsel %vm628, 1, 0
        %v633 = vsel %vm629, 1, 0
        %v634 = vsel %vm630, 1, 0
        %v635 = vcvt.s32.f32 %v631
        %v636 = vcvt.s32.f32 %v632
        %v637 = vcvt.s32.f32 %v633
        %v638 = vcvt.s32.f32 %v634
        %v639 = vld [vmem:[%s486] sm:$0xff]
        %v640 = vld [vmem:[%s486 + $0x8] sm:$0xff]
        %v641 = vld [vmem:[%s486 + $0x10] sm:$0xff]
        %v642 = vld [vmem:[%s486 + $0x18] sm:$0xff]
        %s643 = scalar_lea.vmem [#allocation5], 128
        %v644 = vld [vmem:[%s643] sm:$0xff]
        %v645 = vld [vmem:[%s643 + $0x8] sm:$0xff]
        %v646 = vld [vmem:[%s643 + $0x10] sm:$0xff]
        %v647 = vld [vmem:[%s643 + $0x18] sm:$0xff]
        %v648 = vld [vmem:[%s643 + $0x20] sm:$0xff]
        %v649 = vld [vmem:[%s643 + $0x28] sm:$0xff]
        %v650 = vld [vmem:[%s643 + $0x30] sm:$0xff]
        %v651 = vld [vmem:[%s643 + $0x38] sm:$0xff]
        %v652 = vld [vmem:[%s643 + $0x40] sm:$0xff]
        %v653 = vld [vmem:[%s643 + $0x48] sm:$0xff]
        %v654 = vld [vmem:[%s643 + $0x50] sm:$0xff]
        %v655 = vld [vmem:[%s643 + $0x58] sm:$0xff]
        %v656 = vld [vmem:[%s643 + $0x60] sm:$0xff]
        %v657 = vld [vmem:[%s643 + $0x68] sm:$0xff]
        %v658 = vld [vmem:[%s643 + $0x70] sm:$0xff]
        %v659 = vld [vmem:[%s643 + $0x78] sm:$0xff]
        %v660 = vld [vmem:[%s2] sm:$0x1]
        %v662 = vperm.slane %v660, 0
        %664 = vmatpush.msra.mxu0 %v659
        %665 = vmatpush.msra.mxu0 %v658
        %666 = vmatpush.msra.mxu0 %v657
        %667 = vmatpush.msra.mxu0 %v656
        %668 = vmatpush.msra.mxu0 %v655
        %669 = vmatpush.msra.mxu0 %v654
        %670 = vmatpush.msra.mxu0 %v653
        %671 = vmatpush.msra.mxu0 %v652
        %672 = vmatpush.msra.mxu0 %v651
        %673 = vmatpush.msra.mxu0 %v650
        %674 = vmatpush.msra.mxu0 %v649
        %675 = vmatpush.msra.mxu0 %v648
        %676 = vmatpush.msra.mxu0 %v647
        %677 = vmatpush.msra.mxu0 %v646
        %678 = vmatpush.msra.mxu0 %v645
        %679 = vmatpush.msra.mxu0 %v644
        %680 = vmatmul.f32.gmra.mxu0 %v639
        %v681 = vpop.f32.mrf.mxu0
        %v682 = vadd.f32 %v662, %v681
        %683 = vmatmul.f32.gmra.mxu0 %v640
        %v684 = vpop.f32.mrf.mxu0
        %v685 = vadd.f32 %v662, %v684
        %686 = vmatmul.f32.gmra.mxu0 %v641
        %v687 = vpop.f32.mrf.mxu0
        %v688 = vadd.f32 %v662, %v687
        %689 = vmatmul.f32.gmra.mxu0 %v642
        %v690 = vpop.f32.mrf.mxu0
        %v691 = vadd.f32 %v662, %v690
        %692 = vdwg.mxu0
        %v693 = vrot.slane %v639, 7
        %v694 = vrot.slane %v640, 7
        %v695 = vrot.slane %v641, 7
        %v696 = vrot.slane %v642, 7
        %vm697 = vcmp.lt.s32.totalorder %v563, 1
        %v698 = vsel %vm697, %v695, %v696
        %v699 = vsel %vm697, %v694, %v695
        %v700 = vsel %vm697, %v693, %v694
        %v701 = vsel %vm697, %v696, %v693
        %v702 = vld [vmem:[#allocation5] sm:$0xff]
        %v703 = vld [vmem:[#allocation5 + $0x8] sm:$0xff]
        %v704 = vld [vmem:[#allocation5 + $0x10] sm:$0xff]
        %v705 = vld [vmem:[#allocation5 + $0x18] sm:$0xff]
        %v706 = vld [vmem:[#allocation5 + $0x20] sm:$0xff]
        %v707 = vld [vmem:[#allocation5 + $0x28] sm:$0xff]
        %v708 = vld [vmem:[#allocation5 + $0x30] sm:$0xff]
        %v709 = vld [vmem:[#allocation5 + $0x38] sm:$0xff]
        %v710 = vld [vmem:[#allocation5 + $0x40] sm:$0xff]
        %v711 = vld [vmem:[#allocation5 + $0x48] sm:$0xff]
        %v712 = vld [vmem:[#allocation5 + $0x50] sm:$0xff]
        %v713 = vld [vmem:[#allocation5 + $0x58] sm:$0xff]
        %v714 = vld [vmem:[#allocation5 + $0x60] sm:$0xff]
        %v715 = vld [vmem:[#allocation5 + $0x68] sm:$0xff]
        %v716 = vld [vmem:[#allocation5 + $0x70] sm:$0xff]
        %v717 = vld [vmem:[#allocation5 + $0x78] sm:$0xff]
        %718 = vmatpush.msra.mxu0 %v717
        %719 = vmatpush.msra.mxu0 %v716
        %720 = vmatpush.msra.mxu0 %v715
        %721 = vmatpush.msra.mxu0 %v714
        %722 = vmatpush.msra.mxu0 %v713
        %723 = vmatpush.msra.mxu0 %v712
        %724 = vmatpush.msra.mxu0 %v711
        %725 = vmatpush.msra.mxu0 %v710
        %726 = vmatpush.msra.mxu0 %v709
        %727 = vmatpush.msra.mxu0 %v708
        %728 = vmatpush.msra.mxu0 %v707
        %729 = vmatpush.msra.mxu0 %v706
        %730 = vmatpush.msra.mxu0 %v705
        %731 = vmatpush.msra.mxu0 %v704
        %732 = vmatpush.msra.mxu0 %v703
        %733 = vmatpush.msra.mxu0 %v702
        %734 = vmatmul.f32.gmra.mxu0 %v701
        %v735 = vpop.f32.mrf.mxu0
        %v736 = vadd.f32 0.0, %v735
        %737 = vmatmul.f32.gmra.mxu0 %v700
        %v738 = vpop.f32.mrf.mxu0
        %v739 = vadd.f32 0.0, %v738
        %740 = vmatmul.f32.gmra.mxu0 %v699
        %v741 = vpop.f32.mrf.mxu0
        %v742 = vadd.f32 0.0, %v741
        %743 = vmatmul.f32.gmra.mxu0 %v698
        %v744 = vpop.f32.mrf.mxu0
        %v745 = vadd.f32 0.0, %v744
        %746 = vdwg.mxu0
        %v747 = vmul.f32 %v623, %v736
        %v748 = vmul.f32 %v624, %v739
        %v749 = vmul.f32 %v625, %v742
        %v750 = vmul.f32 %v626, %v745
        %v751 = vadd.f32 %v682, %v747
        %v752 = vadd.f32 %v685, %v748
        %v753 = vadd.f32 %v688, %v749
        %v754 = vadd.f32 %v691, %v750
        %v755 = vrot.slane %v639, 1
        %v756 = vrot.slane %v640, 1
        %v757 = vrot.slane %v641, 1
        %v758 = vrot.slane %v642, 1
        %vm759 = vcmp.lt.s32.totalorder %v563, 7
        %v760 = vsel %vm759, %v757, %v758
        %v761 = vsel %vm759, %v756, %v757
        %v762 = vsel %vm759, %v755, %v756
        %v763 = vsel %vm759, %v758, %v755
        %s764 = scalar_lea.vmem [#allocation5], 256
        %v765 = vld [vmem:[%s764] sm:$0xff]
        %v766 = vld [vmem:[%s764 + $0x8] sm:$0xff]
        %v767 = vld [vmem:[%s764 + $0x10] sm:$0xff]
        %v768 = vld [vmem:[%s764 + $0x18] sm:$0xff]
        %v769 = vld [vmem:[%s764 + $0x20] sm:$0xff]
        %v770 = vld [vmem:[%s764 + $0x28] sm:$0xff]
        %v771 = vld [vmem:[%s764 + $0x30] sm:$0xff]
        %v772 = vld [vmem:[%s764 + $0x38] sm:$0xff]
        %v773 = vld [vmem:[%s764 + $0x40] sm:$0xff]
        %v774 = vld [vmem:[%s764 + $0x48] sm:$0xff]
        %v775 = vld [vmem:[%s764 + $0x50] sm:$0xff]
        %v776 = vld [vmem:[%s764 + $0x58] sm:$0xff]
        %v777 = vld [vmem:[%s764 + $0x60] sm:$0xff]
        %v778 = vld [vmem:[%s764 + $0x68] sm:$0xff]
        %v779 = vld [vmem:[%s764 + $0x70] sm:$0xff]
        %v780 = vld [vmem:[%s764 + $0x78] sm:$0xff]
        %781 = vmatpush.msra.mxu0 %v780
        %782 = vmatpush.msra.mxu0 %v779
        %783 = vmatpush.msra.mxu0 %v778
        %784 = vmatpush.msra.mxu0 %v777
        %785 = vmatpush.msra.mxu0 %v776
        %786 = vmatpush.msra.mxu0 %v775
        %787 = vmatpush.msra.mxu0 %v774
        %788 = vmatpush.msra.mxu0 %v773
        %789 = vmatpush.msra.mxu0 %v772
        %790 = vmatpush.msra.mxu0 %v771
        %791 = vmatpush.msra.mxu0 %v770
        %792 = vmatpush.msra.mxu0 %v769
        %793 = vmatpush.msra.mxu0 %v768
        %794 = vmatpush.msra.mxu0 %v767
        %795 = vmatpush.msra.mxu0 %v766
        %796 = vmatpush.msra.mxu0 %v765
        %797 = vmatmul.f32.gmra.mxu0 %v762
        %v798 = vpop.f32.mrf.mxu0
        %v799 = vadd.f32 0.0, %v798
        %800 = vmatmul.f32.gmra.mxu0 %v761
        %v801 = vpop.f32.mrf.mxu0
        %v802 = vadd.f32 0.0, %v801
        %803 = vmatmul.f32.gmra.mxu0 %v760
        %v804 = vpop.f32.mrf.mxu0
        %v805 = vadd.f32 0.0, %v804
        %806 = vmatmul.f32.gmra.mxu0 %v763
        %v807 = vpop.f32.mrf.mxu0
        %v808 = vadd.f32 0.0, %v807
        %809 = vdwg.mxu0
        %v810 = vmul.f32 %v635, %v799
        %v811 = vmul.f32 %v636, %v802
        %v812 = vmul.f32 %v637, %v805
        %v813 = vmul.f32 %v638, %v808
        %v814 = vadd.f32 %v751, %v810
        %v815 = vadd.f32 %v752, %v811
        %v816 = vadd.f32 %v753, %v812
        %v817 = vadd.f32 %v754, %v813
        %vm818 = vcmp.ge.f32.partialorder %v814, 0.0
        %vm819 = vcmp.ge.f32.partialorder %v815, 0.0
        %vm820 = vcmp.ge.f32.partialorder %v816, 0.0
        %vm821 = vcmp.ge.f32.partialorder %v817, 0.0
        %v822 = vmul.f32 %v814, 0.2
        %v823 = vmul.f32 %v815, 0.2
        %v824 = vmul.f32 %v816, 0.2
        %v825 = vmul.f32 %v817, 0.2
        %v826 = vsel %vm818, %v814, %v822
        %v827 = vsel %vm819, %v815, %v823
        %v828 = vsel %vm820, %v816, %v824
        %v829 = vsel %vm821, %v817, %v825
        %s830 = scalar_lea.vmem [#allocation7], 128
        %v831 = vld [vmem:[%s830] sm:$0xff]
        %v832 = vld [vmem:[%s830 + $0x8] sm:$0xff]
        %v833 = vld [vmem:[%s830 + $0x10] sm:$0xff]
        %v834 = vld [vmem:[%s830 + $0x18] sm:$0xff]
        %v835 = vld [vmem:[%s830 + $0x20] sm:$0xff]
        %v836 = vld [vmem:[%s830 + $0x28] sm:$0xff]
        %v837 = vld [vmem:[%s830 + $0x30] sm:$0xff]
        %v838 = vld [vmem:[%s830 + $0x38] sm:$0xff]
        %v839 = vld [vmem:[%s830 + $0x40] sm:$0xff]
        %v840 = vld [vmem:[%s830 + $0x48] sm:$0xff]
        %v841 = vld [vmem:[%s830 + $0x50] sm:$0xff]
        %v842 = vld [vmem:[%s830 + $0x58] sm:$0xff]
        %v843 = vld [vmem:[%s830 + $0x60] sm:$0xff]
        %v844 = vld [vmem:[%s830 + $0x68] sm:$0xff]
        %v845 = vld [vmem:[%s830 + $0x70] sm:$0xff]
        %v846 = vld [vmem:[%s830 + $0x78] sm:$0xff]
        %v847 = vld [vmem:[%s4] sm:$0x1]
        %v849 = vperm.slane %v847, 0
        %851 = vmatpush.msra.mxu0 %v846
        %852 = vmatpush.msra.mxu0 %v845
        %853 = vmatpush.msra.mxu0 %v844
        %854 = vmatpush.msra.mxu0 %v843
        %855 = vmatpush.msra.mxu0 %v842
        %856 = vmatpush.msra.mxu0 %v841
        %857 = vmatpush.msra.mxu0 %v840
        %858 = vmatpush.msra.mxu0 %v839
        %859 = vmatpush.msra.mxu0 %v838
        %860 = vmatpush.msra.mxu0 %v837
        %861 = vmatpush.msra.mxu0 %v836
        %862 = vmatpush.msra.mxu0 %v835
        %863 = vmatpush.msra.mxu0 %v834
        %864 = vmatpush.msra.mxu0 %v833
        %865 = vmatpush.msra.mxu0 %v832
        %866 = vmatpush.msra.mxu0 %v831
        %867 = vmatmul.f32.gmra.mxu0 %v826
        %v868 = vpop.f32.mrf.mxu0
        %v869 = vadd.f32 %v849, %v868
        %870 = vmatmul.f32.gmra.mxu0 %v827
        %v871 = vpop.f32.mrf.mxu0
        %v872 = vadd.f32 %v849, %v871
        %873 = vmatmul.f32.gmra.mxu0 %v828
        %v874 = vpop.f32.mrf.mxu0
        %v875 = vadd.f32 %v849, %v874
        %876 = vmatmul.f32.gmra.mxu0 %v829
        %v877 = vpop.f32.mrf.mxu0
        %v878 = vadd.f32 %v849, %v877
        %879 = vdwg.mxu0
        %v880 = vrot.slane %v826, 7
        %v881 = vrot.slane %v827, 7
        %v882 = vrot.slane %v828, 7
        %v883 = vrot.slane %v829, 7
        %v884 = vsel %vm697, %v882, %v883
        %v885 = vsel %vm697, %v881, %v882
        %v886 = vsel %vm697, %v880, %v881
        %v887 = vsel %vm697, %v883, %v880
        %v888 = vld [vmem:[#allocation7] sm:$0xff]
        %v889 = vld [vmem:[#allocation7 + $0x8] sm:$0xff]
        %v890 = vld [vmem:[#allocation7 + $0x10] sm:$0xff]
        %v891 = vld [vmem:[#allocation7 + $0x18] sm:$0xff]
        %v892 = vld [vmem:[#allocation7 + $0x20] sm:$0xff]
        %v893 = vld [vmem:[#allocation7 + $0x28] sm:$0xff]
        %v894 = vld [vmem:[#allocation7 + $0x30] sm:$0xff]
        %v895 = vld [vmem:[#allocation7 + $0x38] sm:$0xff]
        %v896 = vld [vmem:[#allocation7 + $0x40] sm:$0xff]
        %v897 = vld [vmem:[#allocation7 + $0x48] sm:$0xff]
        %v898 = vld [vmem:[#allocation7 + $0x50] sm:$0xff]
        %v899 = vld [vmem:[#allocation7 + $0x58] sm:$0xff]
        %v900 = vld [vmem:[#allocation7 + $0x60] sm:$0xff]
        %v901 = vld [vmem:[#allocation7 + $0x68] sm:$0xff]
        %v902 = vld [vmem:[#allocation7 + $0x70] sm:$0xff]
        %v903 = vld [vmem:[#allocation7 + $0x78] sm:$0xff]
        %904 = vmatpush.msra.mxu0 %v903
        %905 = vmatpush.msra.mxu0 %v902
        %906 = vmatpush.msra.mxu0 %v901
        %907 = vmatpush.msra.mxu0 %v900
        %908 = vmatpush.msra.mxu0 %v899
        %909 = vmatpush.msra.mxu0 %v898
        %910 = vmatpush.msra.mxu0 %v897
        %911 = vmatpush.msra.mxu0 %v896
        %912 = vmatpush.msra.mxu0 %v895
        %913 = vmatpush.msra.mxu0 %v894
        %914 = vmatpush.msra.mxu0 %v893
        %915 = vmatpush.msra.mxu0 %v892
        %916 = vmatpush.msra.mxu0 %v891
        %917 = vmatpush.msra.mxu0 %v890
        %918 = vmatpush.msra.mxu0 %v889
        %919 = vmatpush.msra.mxu0 %v888
        %920 = vmatmul.f32.gmra.mxu0 %v887
        %v921 = vpop.f32.mrf.mxu0
        %v922 = vadd.f32 0.0, %v921
        %923 = vmatmul.f32.gmra.mxu0 %v886
        %v924 = vpop.f32.mrf.mxu0
        %v925 = vadd.f32 0.0, %v924
        %926 = vmatmul.f32.gmra.mxu0 %v885
        %v927 = vpop.f32.mrf.mxu0
        %v928 = vadd.f32 0.0, %v927
        %929 = vmatmul.f32.gmra.mxu0 %v884
        %v930 = vpop.f32.mrf.mxu0
        %v931 = vadd.f32 0.0, %v930
        %932 = vdwg.mxu0
        %v933 = vmul.f32 %v623, %v922
        %v934 = vmul.f32 %v624, %v925
        %v935 = vmul.f32 %v625, %v928
        %v936 = vmul.f32 %v626, %v931
        %v937 = vadd.f32 %v869, %v933
        %v938 = vadd.f32 %v872, %v934
        %v939 = vadd.f32 %v875, %v935
        %v940 = vadd.f32 %v878, %v936
        %v941 = vrot.slane %v826, 1
        %v942 = vrot.slane %v827, 1
        %v943 = vrot.slane %v828, 1
        %v944 = vrot.slane %v829, 1
        %v945 = vsel %vm759, %v943, %v944
        %v946 = vsel %vm759, %v942, %v943
        %v947 = vsel %vm759, %v941, %v942
        %v948 = vsel %vm759, %v944, %v941
        %s949 = scalar_lea.vmem [#allocation7], 256
        %v950 = vld [vmem:[%s949] sm:$0xff]
        %v951 = vld [vmem:[%s949 + $0x8] sm:$0xff]
        %v952 = vld [vmem:[%s949 + $0x10] sm:$0xff]
        %v953 = vld [vmem:[%s949 + $0x18] sm:$0xff]
        %v954 = vld [vmem:[%s949 + $0x20] sm:$0xff]
        %v955 = vld [vmem:[%s949 + $0x28] sm:$0xff]
        %v956 = vld [vmem:[%s949 + $0x30] sm:$0xff]
        %v957 = vld [vmem:[%s949 + $0x38] sm:$0xff]
        %v958 = vld [vmem:[%s949 + $0x40] sm:$0xff]
        %v959 = vld [vmem:[%s949 + $0x48] sm:$0xff]
        %v960 = vld [vmem:[%s949 + $0x50] sm:$0xff]
        %v961 = vld [vmem:[%s949 + $0x58] sm:$0xff]
        %v962 = vld [vmem:[%s949 + $0x60] sm:$0xff]
        %v963 = vld [vmem:[%s949 + $0x68] sm:$0xff]
        %v964 = vld [vmem:[%s949 + $0x70] sm:$0xff]
        %v965 = vld [vmem:[%s949 + $0x78] sm:$0xff]
        %966 = vmatpush.msra.mxu0 %v965
        %967 = vmatpush.msra.mxu0 %v964
        %968 = vmatpush.msra.mxu0 %v963
        %969 = vmatpush.msra.mxu0 %v962
        %970 = vmatpush.msra.mxu0 %v961
        %971 = vmatpush.msra.mxu0 %v960
        %972 = vmatpush.msra.mxu0 %v959
        %973 = vmatpush.msra.mxu0 %v958
        %974 = vmatpush.msra.mxu0 %v957
        %975 = vmatpush.msra.mxu0 %v956
        %976 = vmatpush.msra.mxu0 %v955
        %977 = vmatpush.msra.mxu0 %v954
        %978 = vmatpush.msra.mxu0 %v953
        %979 = vmatpush.msra.mxu0 %v952
        %980 = vmatpush.msra.mxu0 %v951
        %981 = vmatpush.msra.mxu0 %v950
        %982 = vmatmul.f32.gmra.mxu0 %v947
        %v983 = vpop.f32.mrf.mxu0
        %v984 = vadd.f32 0.0, %v983
        %985 = vmatmul.f32.gmra.mxu0 %v946
        %v986 = vpop.f32.mrf.mxu0
        %v987 = vadd.f32 0.0, %v986
        %988 = vmatmul.f32.gmra.mxu0 %v945
        %v989 = vpop.f32.mrf.mxu0
        %v990 = vadd.f32 0.0, %v989
        %991 = vmatmul.f32.gmra.mxu0 %v948
        %v992 = vpop.f32.mrf.mxu0
        %v993 = vadd.f32 0.0, %v992
        %994 = vdwg.mxu0
        %v995 = vmul.f32 %v635, %v984
        %v996 = vmul.f32 %v636, %v987
        %v997 = vmul.f32 %v637, %v990
        %v998 = vmul.f32 %v638, %v993
        %v999 = vadd.f32 %v937, %v995
        %v1000 = vadd.f32 %v938, %v996
        %v1001 = vadd.f32 %v939, %v997
        %v1002 = vadd.f32 %v940, %v998
        %vm1003 = vcmp.ge.f32.partialorder %v999, 0.0
        %vm1004 = vcmp.ge.f32.partialorder %v1000, 0.0
        %vm1005 = vcmp.ge.f32.partialorder %v1001, 0.0
        %vm1006 = vcmp.ge.f32.partialorder %v1002, 0.0
        %v1007 = vmul.f32 %v999, 0.2
        %v1008 = vmul.f32 %v1000, 0.2
        %v1009 = vmul.f32 %v1001, 0.2
        %v1010 = vmul.f32 %v1002, 0.2
        %v1011 = vsel %vm1003, %v999, %v1007
        %v1012 = vsel %vm1004, %v1000, %v1008
        %v1013 = vsel %vm1005, %v1001, %v1009
        %v1014 = vsel %vm1006, %v1002, %v1010
        %s1015 = scalar_lea.vmem [#allocation8], 128
        %v1016 = vld [vmem:[%s1015] sm:$0xff]
        %v1017 = vld [vmem:[%s1015 + $0x8] sm:$0xff]
        %v1018 = vld [vmem:[%s1015 + $0x10] sm:$0xff]
        %v1019 = vld [vmem:[%s1015 + $0x18] sm:$0xff]
        %v1020 = vld [vmem:[%s1015 + $0x20] sm:$0xff]
        %v1021 = vld [vmem:[%s1015 + $0x28] sm:$0xff]
        %v1022 = vld [vmem:[%s1015 + $0x30] sm:$0xff]
        %v1023 = vld [vmem:[%s1015 + $0x38] sm:$0xff]
        %v1024 = vld [vmem:[%s1015 + $0x40] sm:$0xff]
        %v1025 = vld [vmem:[%s1015 + $0x48] sm:$0xff]
        %v1026 = vld [vmem:[%s1015 + $0x50] sm:$0xff]
        %v1027 = vld [vmem:[%s1015 + $0x58] sm:$0xff]
        %v1028 = vld [vmem:[%s1015 + $0x60] sm:$0xff]
        %v1029 = vld [vmem:[%s1015 + $0x68] sm:$0xff]
        %v1030 = vld [vmem:[%s1015 + $0x70] sm:$0xff]
        %v1031 = vld [vmem:[%s1015 + $0x78] sm:$0xff]
        %v1032 = vld [vmem:[%s6] sm:$0x1]
        %v1034 = vperm.slane %v1032, 0
        %1036 = vmatpush.msra.mxu0 %v1031
        %1037 = vmatpush.msra.mxu0 %v1030
        %1038 = vmatpush.msra.mxu0 %v1029
        %1039 = vmatpush.msra.mxu0 %v1028
        %1040 = vmatpush.msra.mxu0 %v1027
        %1041 = vmatpush.msra.mxu0 %v1026
        %1042 = vmatpush.msra.mxu0 %v1025
        %1043 = vmatpush.msra.mxu0 %v1024
        %1044 = vmatpush.msra.mxu0 %v1023
        %1045 = vmatpush.msra.mxu0 %v1022
        %1046 = vmatpush.msra.mxu0 %v1021
        %1047 = vmatpush.msra.mxu0 %v1020
        %1048 = vmatpush.msra.mxu0 %v1019
        %1049 = vmatpush.msra.mxu0 %v1018
        %1050 = vmatpush.msra.mxu0 %v1017
        %1051 = vmatpush.msra.mxu0 %v1016
        %1052 = vmatmul.f32.gmra.mxu0 %v1011
        %v1053 = vpop.f32.mrf.mxu0
        %v1054 = vadd.f32 %v1034, %v1053
        %1055 = vmatmul.f32.gmra.mxu0 %v1012
        %v1056 = vpop.f32.mrf.mxu0
        %v1057 = vadd.f32 %v1034, %v1056
        %1058 = vmatmul.f32.gmra.mxu0 %v1013
        %v1059 = vpop.f32.mrf.mxu0
        %v1060 = vadd.f32 %v1034, %v1059
        %1061 = vmatmul.f32.gmra.mxu0 %v1014
        %v1062 = vpop.f32.mrf.mxu0
        %v1063 = vadd.f32 %v1034, %v1062
        %1064 = vdwg.mxu0
        %v1065 = vrot.slane %v1011, 7
        %v1066 = vrot.slane %v1012, 7
        %v1067 = vrot.slane %v1013, 7
        %v1068 = vrot.slane %v1014, 7
        %v1069 = vsel %vm697, %v1067, %v1068
        %v1070 = vsel %vm697, %v1066, %v1067
        %v1071 = vsel %vm697, %v1065, %v1066
        %v1072 = vsel %vm697, %v1068, %v1065
        %v1073 = vld [vmem:[#allocation8] sm:$0xff]
        %v1074 = vld [vmem:[#allocation8 + $0x8] sm:$0xff]
        %v1075 = vld [vmem:[#allocation8 + $0x10] sm:$0xff]
        %v1076 = vld [vmem:[#allocation8 + $0x18] sm:$0xff]
        %v1077 = vld [vmem:[#allocation8 + $0x20] sm:$0xff]
        %v1078 = vld [vmem:[#allocation8 + $0x28] sm:$0xff]
        %v1079 = vld [vmem:[#allocation8 + $0x30] sm:$0xff]
        %v1080 = vld [vmem:[#allocation8 + $0x38] sm:$0xff]
        %v1081 = vld [vmem:[#allocation8 + $0x40] sm:$0xff]
        %v1082 = vld [vmem:[#allocation8 + $0x48] sm:$0xff]
        %v1083 = vld [vmem:[#allocation8 + $0x50] sm:$0xff]
        %v1084 = vld [vmem:[#allocation8 + $0x58] sm:$0xff]
        %v1085 = vld [vmem:[#allocation8 + $0x60] sm:$0xff]
        %v1086 = vld [vmem:[#allocation8 + $0x68] sm:$0xff]
        %v1087 = vld [vmem:[#allocation8 + $0x70] sm:$0xff]
        %v1088 = vld [vmem:[#allocation8 + $0x78] sm:$0xff]
        %1089 = vmatpush.msra.mxu0 %v1088
        %1090 = vmatpush.msra.mxu0 %v1087
        %1091 = vmatpush.msra.mxu0 %v1086
        %1092 = vmatpush.msra.mxu0 %v1085
        %1093 = vmatpush.msra.mxu0 %v1084
        %1094 = vmatpush.msra.mxu0 %v1083
        %1095 = vmatpush.msra.mxu0 %v1082
        %1096 = vmatpush.msra.mxu0 %v1081
        %1097 = vmatpush.msra.mxu0 %v1080
        %1098 = vmatpush.msra.mxu0 %v1079
        %1099 = vmatpush.msra.mxu0 %v1078
        %1100 = vmatpush.msra.mxu0 %v1077
        %1101 = vmatpush.msra.mxu0 %v1076
        %1102 = vmatpush.msra.mxu0 %v1075
        %1103 = vmatpush.msra.mxu0 %v1074
        %1104 = vmatpush.msra.mxu0 %v1073
        %1105 = vmatmul.f32.gmra.mxu0 %v1072
        %v1106 = vpop.f32.mrf.mxu0
        %v1107 = vadd.f32 0.0, %v1106
        %1108 = vmatmul.f32.gmra.mxu0 %v1071
        %v1109 = vpop.f32.mrf.mxu0
        %v1110 = vadd.f32 0.0, %v1109
        %1111 = vmatmul.f32.gmra.mxu0 %v1070
        %v1112 = vpop.f32.mrf.mxu0
        %v1113 = vadd.f32 0.0, %v1112
        %1114 = vmatmul.f32.gmra.mxu0 %v1069
        %v1115 = vpop.f32.mrf.mxu0
        %v1116 = vadd.f32 0.0, %v1115
        %1117 = vdwg.mxu0
        %v1118 = vmul.f32 %v623, %v1107
        %v1119 = vmul.f32 %v624, %v1110
        %v1120 = vmul.f32 %v625, %v1113
        %v1121 = vmul.f32 %v626, %v1116
        %v1122 = vadd.f32 %v1054, %v1118
        %v1123 = vadd.f32 %v1057, %v1119
        %v1124 = vadd.f32 %v1060, %v1120
        %v1125 = vadd.f32 %v1063, %v1121
        %v1126 = vrot.slane %v1011, 1
        %v1127 = vrot.slane %v1012, 1
        %v1128 = vrot.slane %v1013, 1
        %v1129 = vrot.slane %v1014, 1
        %v1130 = vsel %vm759, %v1128, %v1129
        %v1131 = vsel %vm759, %v1127, %v1128
        %v1132 = vsel %vm759, %v1126, %v1127
        %v1133 = vsel %vm759, %v1129, %v1126
        %s1134 = scalar_lea.vmem [#allocation8], 256
        %v1135 = vld [vmem:[%s1134] sm:$0xff]
        %v1136 = vld [vmem:[%s1134 + $0x8] sm:$0xff]
        %v1137 = vld [vmem:[%s1134 + $0x10] sm:$0xff]
        %v1138 = vld [vmem:[%s1134 + $0x18] sm:$0xff]
        %v1139 = vld [vmem:[%s1134 + $0x20] sm:$0xff]
        %v1140 = vld [vmem:[%s1134 + $0x28] sm:$0xff]
        %v1141 = vld [vmem:[%s1134 + $0x30] sm:$0xff]
        %v1142 = vld [vmem:[%s1134 + $0x38] sm:$0xff]
        %v1143 = vld [vmem:[%s1134 + $0x40] sm:$0xff]
        %v1144 = vld [vmem:[%s1134 + $0x48] sm:$0xff]
        %v1145 = vld [vmem:[%s1134 + $0x50] sm:$0xff]
        %v1146 = vld [vmem:[%s1134 + $0x58] sm:$0xff]
        %v1147 = vld [vmem:[%s1134 + $0x60] sm:$0xff]
        %v1148 = vld [vmem:[%s1134 + $0x68] sm:$0xff]
        %v1149 = vld [vmem:[%s1134 + $0x70] sm:$0xff]
        %v1150 = vld [vmem:[%s1134 + $0x78] sm:$0xff]
        %1151 = vmatpush.msra.mxu0 %v1150
        %1152 = vmatpush.msra.mxu0 %v1149
        %1153 = vmatpush.msra.mxu0 %v1148
        %1154 = vmatpush.msra.mxu0 %v1147
        %1155 = vmatpush.msra.mxu0 %v1146
        %1156 = vmatpush.msra.mxu0 %v1145
        %1157 = vmatpush.msra.mxu0 %v1144
        %1158 = vmatpush.msra.mxu0 %v1143
        %1159 = vmatpush.msra.mxu0 %v1142
        %1160 = vmatpush.msra.mxu0 %v1141
        %1161 = vmatpush.msra.mxu0 %v1140
        %1162 = vmatpush.msra.mxu0 %v1139
        %1163 = vmatpush.msra.mxu0 %v1138
        %1164 = vmatpush.msra.mxu0 %v1137
        %1165 = vmatpush.msra.mxu0 %v1136
        %1166 = vmatpush.msra.mxu0 %v1135
        %1167 = vmatmul.f32.gmra.mxu0 %v1132
        %v1168 = vpop.f32.mrf.mxu0
        %v1169 = vadd.f32 0.0, %v1168
        %1170 = vmatmul.f32.gmra.mxu0 %v1131
        %v1171 = vpop.f32.mrf.mxu0
        %v1172 = vadd.f32 0.0, %v1171
        %1173 = vmatmul.f32.gmra.mxu0 %v1130
        %v1174 = vpop.f32.mrf.mxu0
        %v1175 = vadd.f32 0.0, %v1174
        %1176 = vmatmul.f32.gmra.mxu0 %v1133
        %v1177 = vpop.f32.mrf.mxu0
        %v1178 = vadd.f32 0.0, %v1177
        %1179 = vdwg.mxu0
        %v1180 = vmul.f32 %v635, %v1169
        %v1181 = vmul.f32 %v636, %v1172
        %v1182 = vmul.f32 %v637, %v1175
        %v1183 = vmul.f32 %v638, %v1178
        %v1184 = vadd.f32 %v1122, %v1180
        %v1185 = vadd.f32 %v1123, %v1181
        %v1186 = vadd.f32 %v1124, %v1182
        %v1187 = vadd.f32 %v1125, %v1183
        %v1188 = vadd.f32 %v826, %v1184
        %v1189 = vadd.f32 %v827, %v1185
        %v1190 = vadd.f32 %v828, %v1186
        %v1191 = vadd.f32 %v829, %v1187
        %s1192 = scalar_lea.vmem [#allocation10], 128
        %v1193 = vld [vmem:[%s1192] sm:$0xff]
        %v1194 = vld [vmem:[%s1192 + $0x8] sm:$0xff]
        %v1195 = vld [vmem:[%s1192 + $0x10] sm:$0xff]
        %v1196 = vld [vmem:[%s1192 + $0x18] sm:$0xff]
        %v1197 = vld [vmem:[%s1192 + $0x20] sm:$0xff]
        %v1198 = vld [vmem:[%s1192 + $0x28] sm:$0xff]
        %v1199 = vld [vmem:[%s1192 + $0x30] sm:$0xff]
        %v1200 = vld [vmem:[%s1192 + $0x38] sm:$0xff]
        %v1201 = vld [vmem:[%s1192 + $0x40] sm:$0xff]
        %v1202 = vld [vmem:[%s1192 + $0x48] sm:$0xff]
        %v1203 = vld [vmem:[%s1192 + $0x50] sm:$0xff]
        %v1204 = vld [vmem:[%s1192 + $0x58] sm:$0xff]
        %v1205 = vld [vmem:[%s1192 + $0x60] sm:$0xff]
        %v1206 = vld [vmem:[%s1192 + $0x68] sm:$0xff]
        %v1207 = vld [vmem:[%s1192 + $0x70] sm:$0xff]
        %v1208 = vld [vmem:[%s1192 + $0x78] sm:$0xff]
        %v1209 = vld [vmem:[%s8] sm:$0x1]
        %v1211 = vperm.slane %v1209, 0
        %1213 = vmatpush.msra.mxu0 %v1208
        %1214 = vmatpush.msra.mxu0 %v1207
        %1215 = vmatpush.msra.mxu0 %v1206
        %1216 = vmatpush.msra.mxu0 %v1205
        %1217 = vmatpush.msra.mxu0 %v1204
        %1218 = vmatpush.msra.mxu0 %v1203
        %1219 = vmatpush.msra.mxu0 %v1202
        %1220 = vmatpush.msra.mxu0 %v1201
        %1221 = vmatpush.msra.mxu0 %v1200
        %1222 = vmatpush.msra.mxu0 %v1199
        %1223 = vmatpush.msra.mxu0 %v1198
        %1224 = vmatpush.msra.mxu0 %v1197
        %1225 = vmatpush.msra.mxu0 %v1196
        %1226 = vmatpush.msra.mxu0 %v1195
        %1227 = vmatpush.msra.mxu0 %v1194
        %1228 = vmatpush.msra.mxu0 %v1193
        %1229 = vmatmul.f32.gmra.mxu0 %v1188
        %v1230 = vpop.f32.mrf.mxu0
        %v1231 = vadd.f32 %v1211, %v1230
        %1232 = vmatmul.f32.gmra.mxu0 %v1189
        %v1233 = vpop.f32.mrf.mxu0
        %v1234 = vadd.f32 %v1211, %v1233
        %1235 = vmatmul.f32.gmra.mxu0 %v1190
        %v1236 = vpop.f32.mrf.mxu0
        %v1237 = vadd.f32 %v1211, %v1236
        %1238 = vmatmul.f32.gmra.mxu0 %v1191
        %v1239 = vpop.f32.mrf.mxu0
        %v1240 = vadd.f32 %v1211, %v1239
        %1241 = vdwg.mxu0
        %v1242 = vrot.slane %v1188, 7
        %v1243 = vrot.slane %v1189, 7
        %v1244 = vrot.slane %v1190, 7
        %v1245 = vrot.slane %v1191, 7
        %v1246 = vsel %vm697, %v1244, %v1245
        %v1247 = vsel %vm697, %v1243, %v1244
        %v1248 = vsel %vm697, %v1242, %v1243
        %v1249 = vsel %vm697, %v1245, %v1242
        %v1250 = vld [vmem:[#allocation10] sm:$0xff]
        %v1251 = vld [vmem:[#allocation10 + $0x8] sm:$0xff]
        %v1252 = vld [vmem:[#allocation10 + $0x10] sm:$0xff]
        %v1253 = vld [vmem:[#allocation10 + $0x18] sm:$0xff]
        %v1254 = vld [vmem:[#allocation10 + $0x20] sm:$0xff]
        %v1255 = vld [vmem:[#allocation10 + $0x28] sm:$0xff]
        %v1256 = vld [vmem:[#allocation10 + $0x30] sm:$0xff]
        %v1257 = vld [vmem:[#allocation10 + $0x38] sm:$0xff]
        %v1258 = vld [vmem:[#allocation10 + $0x40] sm:$0xff]
        %v1259 = vld [vmem:[#allocation10 + $0x48] sm:$0xff]
        %v1260 = vld [vmem:[#allocation10 + $0x50] sm:$0xff]
        %v1261 = vld [vmem:[#allocation10 + $0x58] sm:$0xff]
        %v1262 = vld [vmem:[#allocation10 + $0x60] sm:$0xff]
        %v1263 = vld [vmem:[#allocation10 + $0x68] sm:$0xff]
        %v1264 = vld [vmem:[#allocation10 + $0x70] sm:$0xff]
        %v1265 = vld [vmem:[#allocation10 + $0x78] sm:$0xff]
        %1266 = vmatpush.msra.mxu0 %v1265
        %1267 = vmatpush.msra.mxu0 %v1264
        %1268 = vmatpush.msra.mxu0 %v1263
        %1269 = vmatpush.msra.mxu0 %v1262
        %1270 = vmatpush.msra.mxu0 %v1261
        %1271 = vmatpush.msra.mxu0 %v1260
        %1272 = vmatpush.msra.mxu0 %v1259
        %1273 = vmatpush.msra.mxu0 %v1258
        %1274 = vmatpush.msra.mxu0 %v1257
        %1275 = vmatpush.msra.mxu0 %v1256
        %1276 = vmatpush.msra.mxu0 %v1255
        %1277 = vmatpush.msra.mxu0 %v1254
        %1278 = vmatpush.msra.mxu0 %v1253
        %1279 = vmatpush.msra.mxu0 %v1252
        %1280 = vmatpush.msra.mxu0 %v1251
        %1281 = vmatpush.msra.mxu0 %v1250
        %1282 = vmatmul.f32.gmra.mxu0 %v1249
        %v1283 = vpop.f32.mrf.mxu0
        %v1284 = vadd.f32 0.0, %v1283
        %1285 = vmatmul.f32.gmra.mxu0 %v1248
        %v1286 = vpop.f32.mrf.mxu0
        %v1287 = vadd.f32 0.0, %v1286
        %1288 = vmatmul.f32.gmra.mxu0 %v1247
        %v1289 = vpop.f32.mrf.mxu0
        %v1290 = vadd.f32 0.0, %v1289
        %1291 = vmatmul.f32.gmra.mxu0 %v1246
        %v1292 = vpop.f32.mrf.mxu0
        %v1293 = vadd.f32 0.0, %v1292
        %1294 = vdwg.mxu0
        %v1295 = vmul.f32 %v623, %v1284
        %v1296 = vmul.f32 %v624, %v1287
        %v1297 = vmul.f32 %v625, %v1290
        %v1298 = vmul.f32 %v626, %v1293
        %v1299 = vadd.f32 %v1231, %v1295
        %v1300 = vadd.f32 %v1234, %v1296
        %v1301 = vadd.f32 %v1237, %v1297
        %v1302 = vadd.f32 %v1240, %v1298
        %v1303 = vrot.slane %v1188, 1
        %v1304 = vrot.slane %v1189, 1
        %v1305 = vrot.slane %v1190, 1
        %v1306 = vrot.slane %v1191, 1
        %v1307 = vsel %vm759, %v1305, %v1306
        %v1308 = vsel %vm759, %v1304, %v1305
        %v1309 = vsel %vm759, %v1303, %v1304
        %v1310 = vsel %vm759, %v1306, %v1303
        %s1311 = scalar_lea.vmem [#allocation10], 256
        %v1312 = vld [vmem:[%s1311] sm:$0xff]
        %v1313 = vld [vmem:[%s1311 + $0x8] sm:$0xff]
        %v1314 = vld [vmem:[%s1311 + $0x10] sm:$0xff]
        %v1315 = vld [vmem:[%s1311 + $0x18] sm:$0xff]
        %v1316 = vld [vmem:[%s1311 + $0x20] sm:$0xff]
        %v1317 = vld [vmem:[%s1311 + $0x28] sm:$0xff]
        %v1318 = vld [vmem:[%s1311 + $0x30] sm:$0xff]
        %v1319 = vld [vmem:[%s1311 + $0x38] sm:$0xff]
        %v1320 = vld [vmem:[%s1311 + $0x40] sm:$0xff]
        %v1321 = vld [vmem:[%s1311 + $0x48] sm:$0xff]
        %v1322 = vld [vmem:[%s1311 + $0x50] sm:$0xff]
        %v1323 = vld [vmem:[%s1311 + $0x58] sm:$0xff]
        %v1324 = vld [vmem:[%s1311 + $0x60] sm:$0xff]
        %v1325 = vld [vmem:[%s1311 + $0x68] sm:$0xff]
        %v1326 = vld [vmem:[%s1311 + $0x70] sm:$0xff]
        %v1327 = vld [vmem:[%s1311 + $0x78] sm:$0xff]
        %1328 = vmatpush.msra.mxu0 %v1327
        %1329 = vmatpush.msra.mxu0 %v1326
        %1330 = vmatpush.msra.mxu0 %v1325
        %1331 = vmatpush.msra.mxu0 %v1324
        %1332 = vmatpush.msra.mxu0 %v1323
        %1333 = vmatpush.msra.mxu0 %v1322
        %1334 = vmatpush.msra.mxu0 %v1321
        %1335 = vmatpush.msra.mxu0 %v1320
        %1336 = vmatpush.msra.mxu0 %v1319
        %1337 = vmatpush.msra.mxu0 %v1318
        %1338 = vmatpush.msra.mxu0 %v1317
        %1339 = vmatpush.msra.mxu0 %v1316
        %1340 = vmatpush.msra.mxu0 %v1315
        %1341 = vmatpush.msra.mxu0 %v1314
        %1342 = vmatpush.msra.mxu0 %v1313
        %1343 = vmatpush.msra.mxu0 %v1312
        %1344 = vmatmul.f32.gmra.mxu0 %v1309
        %v1345 = vpop.f32.mrf.mxu0
        %v1346 = vadd.f32 0.0, %v1345
        %1347 = vmatmul.f32.gmra.mxu0 %v1308
        %v1348 = vpop.f32.mrf.mxu0
        %v1349 = vadd.f32 0.0, %v1348
        %1350 = vmatmul.f32.gmra.mxu0 %v1307
        %v1351 = vpop.f32.mrf.mxu0
        %v1352 = vadd.f32 0.0, %v1351
        %1353 = vmatmul.f32.gmra.mxu0 %v1310
        %v1354 = vpop.f32.mrf.mxu0
        %v1355 = vadd.f32 0.0, %v1354
        %1356 = vdwg.mxu0
        %v1357 = vmul.f32 %v635, %v1346
        %v1358 = vmul.f32 %v636, %v1349
        %v1359 = vmul.f32 %v637, %v1352
        %v1360 = vmul.f32 %v638, %v1355
        %v1361 = vadd.f32 %v1299, %v1357
        %v1362 = vadd.f32 %v1300, %v1358
        %v1363 = vadd.f32 %v1301, %v1359
        %v1364 = vadd.f32 %v1302, %v1360
        %vm1365 = vcmp.ge.f32.partialorder %v1361, 0.0
        %vm1366 = vcmp.ge.f32.partialorder %v1362, 0.0
        %vm1367 = vcmp.ge.f32.partialorder %v1363, 0.0
        %vm1368 = vcmp.ge.f32.partialorder %v1364, 0.0
        %v1369 = vmul.f32 %v1361, 0.2
        %v1370 = vmul.f32 %v1362, 0.2
        %v1371 = vmul.f32 %v1363, 0.2
        %v1372 = vmul.f32 %v1364, 0.2
        %v1373 = vsel %vm1365, %v1361, %v1369
        %v1374 = vsel %vm1366, %v1362, %v1370
        %v1375 = vsel %vm1367, %v1363, %v1371
        %v1376 = vsel %vm1368, %v1364, %v1372
        %s1377 = scalar_lea.vmem [#allocation11], 128
        %v1378 = vld [vmem:[%s1377] sm:$0xff]
        %v1379 = vld [vmem:[%s1377 + $0x8] sm:$0xff]
        %v1380 = vld [vmem:[%s1377 + $0x10] sm:$0xff]
        %v1381 = vld [vmem:[%s1377 + $0x18] sm:$0xff]
        %v1382 = vld [vmem:[%s1377 + $0x20] sm:$0xff]
        %v1383 = vld [vmem:[%s1377 + $0x28] sm:$0xff]
        %v1384 = vld [vmem:[%s1377 + $0x30] sm:$0xff]
        %v1385 = vld [vmem:[%s1377 + $0x38] sm:$0xff]
        %v1386 = vld [vmem:[%s1377 + $0x40] sm:$0xff]
        %v1387 = vld [vmem:[%s1377 + $0x48] sm:$0xff]
        %v1388 = vld [vmem:[%s1377 + $0x50] sm:$0xff]
        %v1389 = vld [vmem:[%s1377 + $0x58] sm:$0xff]
        %v1390 = vld [vmem:[%s1377 + $0x60] sm:$0xff]
        %v1391 = vld [vmem:[%s1377 + $0x68] sm:$0xff]
        %v1392 = vld [vmem:[%s1377 + $0x70] sm:$0xff]
        %v1393 = vld [vmem:[%s1377 + $0x78] sm:$0xff]
        %v1394 = vld [vmem:[%s10] sm:$0x1]
        %v1396 = vperm.slane %v1394, 0
        %1398 = vmatpush.msra.mxu0 %v1393
        %1399 = vmatpush.msra.mxu0 %v1392
        %1400 = vmatpush.msra.mxu0 %v1391
        %1401 = vmatpush.msra.mxu0 %v1390
        %1402 = vmatpush.msra.mxu0 %v1389
        %1403 = vmatpush.msra.mxu0 %v1388
        %1404 = vmatpush.msra.mxu0 %v1387
        %1405 = vmatpush.msra.mxu0 %v1386
        %1406 = vmatpush.msra.mxu0 %v1385
        %1407 = vmatpush.msra.mxu0 %v1384
        %1408 = vmatpush.msra.mxu0 %v1383
        %1409 = vmatpush.msra.mxu0 %v1382
        %1410 = vmatpush.msra.mxu0 %v1381
        %1411 = vmatpush.msra.mxu0 %v1380
        %1412 = vmatpush.msra.mxu0 %v1379
        %1413 = vmatpush.msra.mxu0 %v1378
        %1414 = vmatmul.f32.gmra.mxu0 %v1373
        %v1415 = vpop.f32.mrf.mxu0
        %v1416 = vadd.f32 %v1396, %v1415
        %1417 = vmatmul.f32.gmra.mxu0 %v1374
        %v1418 = vpop.f32.mrf.mxu0
        %v1419 = vadd.f32 %v1396, %v1418
        %1420 = vmatmul.f32.gmra.mxu0 %v1375
        %v1421 = vpop.f32.mrf.mxu0
        %v1422 = vadd.f32 %v1396, %v1421
        %1423 = vmatmul.f32.gmra.mxu0 %v1376
        %v1424 = vpop.f32.mrf.mxu0
        %v1425 = vadd.f32 %v1396, %v1424
        %1426 = vdwg.mxu0
        %v1427 = vrot.slane %v1373, 7
        %v1428 = vrot.slane %v1374, 7
        %v1429 = vrot.slane %v1375, 7
        %v1430 = vrot.slane %v1376, 7
        %v1431 = vsel %vm697, %v1429, %v1430
        %v1432 = vsel %vm697, %v1428, %v1429
        %v1433 = vsel %vm697, %v1427, %v1428
        %v1434 = vsel %vm697, %v1430, %v1427
        %v1435 = vld [vmem:[#allocation11] sm:$0xff]
        %v1436 = vld [vmem:[#allocation11 + $0x8] sm:$0xff]
        %v1437 = vld [vmem:[#allocation11 + $0x10] sm:$0xff]
        %v1438 = vld [vmem:[#allocation11 + $0x18] sm:$0xff]
        %v1439 = vld [vmem:[#allocation11 + $0x20] sm:$0xff]
        %v1440 = vld [vmem:[#allocation11 + $0x28] sm:$0xff]
        %v1441 = vld [vmem:[#allocation11 + $0x30] sm:$0xff]
        %v1442 = vld [vmem:[#allocation11 + $0x38] sm:$0xff]
        %v1443 = vld [vmem:[#allocation11 + $0x40] sm:$0xff]
        %v1444 = vld [vmem:[#allocation11 + $0x48] sm:$0xff]
        %v1445 = vld [vmem:[#allocation11 + $0x50] sm:$0xff]
        %v1446 = vld [vmem:[#allocation11 + $0x58] sm:$0xff]
        %v1447 = vld [vmem:[#allocation11 + $0x60] sm:$0xff]
        %v1448 = vld [vmem:[#allocation11 + $0x68] sm:$0xff]
        %v1449 = vld [vmem:[#allocation11 + $0x70] sm:$0xff]
        %v1450 = vld [vmem:[#allocation11 + $0x78] sm:$0xff]
        %1451 = vmatpush.msra.mxu0 %v1450
        %1452 = vmatpush.msra.mxu0 %v1449
        %1453 = vmatpush.msra.mxu0 %v1448
        %1454 = vmatpush.msra.mxu0 %v1447
        %1455 = vmatpush.msra.mxu0 %v1446
        %1456 = vmatpush.msra.mxu0 %v1445
        %1457 = vmatpush.msra.mxu0 %v1444
        %1458 = vmatpush.msra.mxu0 %v1443
        %1459 = vmatpush.msra.mxu0 %v1442
        %1460 = vmatpush.msra.mxu0 %v1441
        %1461 = vmatpush.msra.mxu0 %v1440
        %1462 = vmatpush.msra.mxu0 %v1439
        %1463 = vmatpush.msra.mxu0 %v1438
        %1464 = vmatpush.msra.mxu0 %v1437
        %1465 = vmatpush.msra.mxu0 %v1436
        %1466 = vmatpush.msra.mxu0 %v1435
        %1467 = vmatmul.f32.gmra.mxu0 %v1434
        %v1468 = vpop.f32.mrf.mxu0
        %v1469 = vadd.f32 0.0, %v1468
        %1470 = vmatmul.f32.gmra.mxu0 %v1433
        %v1471 = vpop.f32.mrf.mxu0
        %v1472 = vadd.f32 0.0, %v1471
        %1473 = vmatmul.f32.gmra.mxu0 %v1432
        %v1474 = vpop.f32.mrf.mxu0
        %v1475 = vadd.f32 0.0, %v1474
        %1476 = vmatmul.f32.gmra.mxu0 %v1431
        %v1477 = vpop.f32.mrf.mxu0
        %v1478 = vadd.f32 0.0, %v1477
        %1479 = vdwg.mxu0
        %v1480 = vmul.f32 %v623, %v1469
        %v1481 = vmul.f32 %v624, %v1472
        %v1482 = vmul.f32 %v625, %v1475
        %v1483 = vmul.f32 %v626, %v1478
        %v1484 = vadd.f32 %v1416, %v1480
        %v1485 = vadd.f32 %v1419, %v1481
        %v1486 = vadd.f32 %v1422, %v1482
        %v1487 = vadd.f32 %v1425, %v1483
        %v1488 = vrot.slane %v1373, 1
        %v1489 = vrot.slane %v1374, 1
        %v1490 = vrot.slane %v1375, 1
        %v1491 = vrot.slane %v1376, 1
        %v1492 = vsel %vm759, %v1490, %v1491
        %v1493 = vsel %vm759, %v1489, %v1490
        %v1494 = vsel %vm759, %v1488, %v1489
        %v1495 = vsel %vm759, %v1491, %v1488
        %s1496 = scalar_lea.vmem [#allocation11], 256
        %v1497 = vld [vmem:[%s1496] sm:$0xff]
        %v1498 = vld [vmem:[%s1496 + $0x8] sm:$0xff]
        %v1499 = vld [vmem:[%s1496 + $0x10] sm:$0xff]
        %v1500 = vld [vmem:[%s1496 + $0x18] sm:$0xff]
        %v1501 = vld [vmem:[%s1496 + $0x20] sm:$0xff]
        %v1502 = vld [vmem:[%s1496 + $0x28] sm:$0xff]
        %v1503 = vld [vmem:[%s1496 + $0x30] sm:$0xff]
        %v1504 = vld [vmem:[%s1496 + $0x38] sm:$0xff]
        %v1505 = vld [vmem:[%s1496 + $0x40] sm:$0xff]
        %v1506 = vld [vmem:[%s1496 + $0x48] sm:$0xff]
        %v1507 = vld [vmem:[%s1496 + $0x50] sm:$0xff]
        %v1508 = vld [vmem:[%s1496 + $0x58] sm:$0xff]
        %v1509 = vld [vmem:[%s1496 + $0x60] sm:$0xff]
        %v1510 = vld [vmem:[%s1496 + $0x68] sm:$0xff]
        %v1511 = vld [vmem:[%s1496 + $0x70] sm:$0xff]
        %v1512 = vld [vmem:[%s1496 + $0x78] sm:$0xff]
        %1513 = vmatpush.msra.mxu0 %v1512
        %1514 = vmatpush.msra.mxu0 %v1511
        %1515 = vmatpush.msra.mxu0 %v1510
        %1516 = vmatpush.msra.mxu0 %v1509
        %1517 = vmatpush.msra.mxu0 %v1508
        %1518 = vmatpush.msra.mxu0 %v1507
        %1519 = vmatpush.msra.mxu0 %v1506
        %1520 = vmatpush.msra.mxu0 %v1505
        %1521 = vmatpush.msra.mxu0 %v1504
        %1522 = vmatpush.msra.mxu0 %v1503
        %1523 = vmatpush.msra.mxu0 %v1502
        %1524 = vmatpush.msra.mxu0 %v1501
        %1525 = vmatpush.msra.mxu0 %v1500
        %1526 = vmatpush.msra.mxu0 %v1499
        %1527 = vmatpush.msra.mxu0 %v1498
        %1528 = vmatpush.msra.mxu0 %v1497
        %1529 = vmatmul.f32.gmra.mxu0 %v1494
        %v1530 = vpop.f32.mrf.mxu0
        %v1531 = vadd.f32 0.0, %v1530
        %1532 = vmatmul.f32.gmra.mxu0 %v1493
        %v1533 = vpop.f32.mrf.mxu0
        %v1534 = vadd.f32 0.0, %v1533
        %1535 = vmatmul.f32.gmra.mxu0 %v1492
        %v1536 = vpop.f32.mrf.mxu0
        %v1537 = vadd.f32 0.0, %v1536
        %1538 = vmatmul.f32.gmra.mxu0 %v1495
        %v1539 = vpop.f32.mrf.mxu0
        %v1540 = vadd.f32 0.0, %v1539
        %1541 = vdwg.mxu0
        %v1542 = vmul.f32 %v635, %v1531
        %v1543 = vmul.f32 %v636, %v1534
        %v1544 = vmul.f32 %v637, %v1537
        %v1545 = vmul.f32 %v638, %v1540
        %v1546 = vadd.f32 %v1484, %v1542
        %v1547 = vadd.f32 %v1485, %v1543
        %v1548 = vadd.f32 %v1486, %v1544
        %v1549 = vadd.f32 %v1487, %v1545
        %vm1550 = vcmp.ge.f32.partialorder %v1546, 0.0
        %vm1551 = vcmp.ge.f32.partialorder %v1547, 0.0
        %vm1552 = vcmp.ge.f32.partialorder %v1548, 0.0
        %vm1553 = vcmp.ge.f32.partialorder %v1549, 0.0
        %v1554 = vmul.f32 %v1546, 0.2
        %v1555 = vmul.f32 %v1547, 0.2
        %v1556 = vmul.f32 %v1548, 0.2
        %v1557 = vmul.f32 %v1549, 0.2
        %v1558 = vsel %vm1550, %v1546, %v1554
        %v1559 = vsel %vm1551, %v1547, %v1555
        %v1560 = vsel %vm1552, %v1548, %v1556
        %v1561 = vsel %vm1553, %v1549, %v1557
        %s1562 = scalar_lea.vmem [#allocation13], 128
        %v1563 = vld [vmem:[%s1562] sm:$0xff]
        %v1564 = vld [vmem:[%s1562 + $0x8] sm:$0xff]
        %v1565 = vld [vmem:[%s1562 + $0x10] sm:$0xff]
        %v1566 = vld [vmem:[%s1562 + $0x18] sm:$0xff]
        %v1567 = vld [vmem:[%s1562 + $0x20] sm:$0xff]
        %v1568 = vld [vmem:[%s1562 + $0x28] sm:$0xff]
        %v1569 = vld [vmem:[%s1562 + $0x30] sm:$0xff]
        %v1570 = vld [vmem:[%s1562 + $0x38] sm:$0xff]
        %v1571 = vld [vmem:[%s1562 + $0x40] sm:$0xff]
        %v1572 = vld [vmem:[%s1562 + $0x48] sm:$0xff]
        %v1573 = vld [vmem:[%s1562 + $0x50] sm:$0xff]
        %v1574 = vld [vmem:[%s1562 + $0x58] sm:$0xff]
        %v1575 = vld [vmem:[%s1562 + $0x60] sm:$0xff]
        %v1576 = vld [vmem:[%s1562 + $0x68] sm:$0xff]
        %v1577 = vld [vmem:[%s1562 + $0x70] sm:$0xff]
        %v1578 = vld [vmem:[%s1562 + $0x78] sm:$0xff]
        %v1579 = vld [vmem:[%s12] sm:$0x1]
        %v1581 = vperm.slane %v1579, 0
        %1583 = vmatpush.msra.mxu0 %v1578
        %1584 = vmatpush.msra.mxu0 %v1577
        %1585 = vmatpush.msra.mxu0 %v1576
        %1586 = vmatpush.msra.mxu0 %v1575
        %1587 = vmatpush.msra.mxu0 %v1574
        %1588 = vmatpush.msra.mxu0 %v1573
        %1589 = vmatpush.msra.mxu0 %v1572
        %1590 = vmatpush.msra.mxu0 %v1571
        %1591 = vmatpush.msra.mxu0 %v1570
        %1592 = vmatpush.msra.mxu0 %v1569
        %1593 = vmatpush.msra.mxu0 %v1568
        %1594 = vmatpush.msra.mxu0 %v1567
        %1595 = vmatpush.msra.mxu0 %v1566
        %1596 = vmatpush.msra.mxu0 %v1565
        %1597 = vmatpush.msra.mxu0 %v1564
        %1598 = vmatpush.msra.mxu0 %v1563
        %1599 = vmatmul.f32.gmra.mxu0 %v1558
        %v1600 = vpop.f32.mrf.mxu0
        %v1601 = vadd.f32 %v1581, %v1600
        %1602 = vmatmul.f32.gmra.mxu0 %v1559
        %v1603 = vpop.f32.mrf.mxu0
        %v1604 = vadd.f32 %v1581, %v1603
        %1605 = vmatmul.f32.gmra.mxu0 %v1560
        %v1606 = vpop.f32.mrf.mxu0
        %v1607 = vadd.f32 %v1581, %v1606
        %1608 = vmatmul.f32.gmra.mxu0 %v1561
        %v1609 = vpop.f32.mrf.mxu0
        %v1610 = vadd.f32 %v1581, %v1609
        %1611 = vdwg.mxu0
        %v1612 = vrot.slane %v1558, 7
        %v1613 = vrot.slane %v1559, 7
        %v1614 = vrot.slane %v1560, 7
        %v1615 = vrot.slane %v1561, 7
        %v1616 = vsel %vm697, %v1614, %v1615
        %v1617 = vsel %vm697, %v1613, %v1614
        %v1618 = vsel %vm697, %v1612, %v1613
        %v1619 = vsel %vm697, %v1615, %v1612
        %v1620 = vld [vmem:[#allocation13] sm:$0xff]
        %v1621 = vld [vmem:[#allocation13 + $0x8] sm:$0xff]
        %v1622 = vld [vmem:[#allocation13 + $0x10] sm:$0xff]
        %v1623 = vld [vmem:[#allocation13 + $0x18] sm:$0xff]
        %v1624 = vld [vmem:[#allocation13 + $0x20] sm:$0xff]
        %v1625 = vld [vmem:[#allocation13 + $0x28] sm:$0xff]
        %v1626 = vld [vmem:[#allocation13 + $0x30] sm:$0xff]
        %v1627 = vld [vmem:[#allocation13 + $0x38] sm:$0xff]
        %v1628 = vld [vmem:[#allocation13 + $0x40] sm:$0xff]
        %v1629 = vld [vmem:[#allocation13 + $0x48] sm:$0xff]
        %v1630 = vld [vmem:[#allocation13 + $0x50] sm:$0xff]
        %v1631 = vld [vmem:[#allocation13 + $0x58] sm:$0xff]
        %v1632 = vld [vmem:[#allocation13 + $0x60] sm:$0xff]
        %v1633 = vld [vmem:[#allocation13 + $0x68] sm:$0xff]
        %v1634 = vld [vmem:[#allocation13 + $0x70] sm:$0xff]
        %v1635 = vld [vmem:[#allocation13 + $0x78] sm:$0xff]
        %1636 = vmatpush.msra.mxu0 %v1635
        %1637 = vmatpush.msra.mxu0 %v1634
        %1638 = vmatpush.msra.mxu0 %v1633
        %1639 = vmatpush.msra.mxu0 %v1632
        %1640 = vmatpush.msra.mxu0 %v1631
        %1641 = vmatpush.msra.mxu0 %v1630
        %1642 = vmatpush.msra.mxu0 %v1629
        %1643 = vmatpush.msra.mxu0 %v1628
        %1644 = vmatpush.msra.mxu0 %v1627
        %1645 = vmatpush.msra.mxu0 %v1626
        %1646 = vmatpush.msra.mxu0 %v1625
        %1647 = vmatpush.msra.mxu0 %v1624
        %1648 = vmatpush.msra.mxu0 %v1623
        %1649 = vmatpush.msra.mxu0 %v1622
        %1650 = vmatpush.msra.mxu0 %v1621
        %1651 = vmatpush.msra.mxu0 %v1620
        %1652 = vmatmul.f32.gmra.mxu0 %v1619
        %v1653 = vpop.f32.mrf.mxu0
        %v1654 = vadd.f32 0.0, %v1653
        %1655 = vmatmul.f32.gmra.mxu0 %v1618
        %v1656 = vpop.f32.mrf.mxu0
        %v1657 = vadd.f32 0.0, %v1656
        %1658 = vmatmul.f32.gmra.mxu0 %v1617
        %v1659 = vpop.f32.mrf.mxu0
        %v1660 = vadd.f32 0.0, %v1659
        %1661 = vmatmul.f32.gmra.mxu0 %v1616
        %v1662 = vpop.f32.mrf.mxu0
        %v1663 = vadd.f32 0.0, %v1662
        %1664 = vdwg.mxu0
        %v1665 = vmul.f32 %v623, %v1654
        %v1666 = vmul.f32 %v624, %v1657
        %v1667 = vmul.f32 %v625, %v1660
        %v1668 = vmul.f32 %v626, %v1663
        %v1669 = vadd.f32 %v1601, %v1665
        %v1670 = vadd.f32 %v1604, %v1666
        %v1671 = vadd.f32 %v1607, %v1667
        %v1672 = vadd.f32 %v1610, %v1668
        %v1673 = vrot.slane %v1558, 1
        %v1674 = vrot.slane %v1559, 1
        %v1675 = vrot.slane %v1560, 1
        %v1676 = vrot.slane %v1561, 1
        %v1677 = vsel %vm759, %v1675, %v1676
        %v1678 = vsel %vm759, %v1674, %v1675
        %v1679 = vsel %vm759, %v1673, %v1674
        %v1680 = vsel %vm759, %v1676, %v1673
        %s1681 = scalar_lea.vmem [#allocation13], 256
        %v1682 = vld [vmem:[%s1681] sm:$0xff]
        %v1683 = vld [vmem:[%s1681 + $0x8] sm:$0xff]
        %v1684 = vld [vmem:[%s1681 + $0x10] sm:$0xff]
        %v1685 = vld [vmem:[%s1681 + $0x18] sm:$0xff]
        %v1686 = vld [vmem:[%s1681 + $0x20] sm:$0xff]
        %v1687 = vld [vmem:[%s1681 + $0x28] sm:$0xff]
        %v1688 = vld [vmem:[%s1681 + $0x30] sm:$0xff]
        %v1689 = vld [vmem:[%s1681 + $0x38] sm:$0xff]
        %v1690 = vld [vmem:[%s1681 + $0x40] sm:$0xff]
        %v1691 = vld [vmem:[%s1681 + $0x48] sm:$0xff]
        %v1692 = vld [vmem:[%s1681 + $0x50] sm:$0xff]
        %v1693 = vld [vmem:[%s1681 + $0x58] sm:$0xff]
        %v1694 = vld [vmem:[%s1681 + $0x60] sm:$0xff]
        %v1695 = vld [vmem:[%s1681 + $0x68] sm:$0xff]
        %v1696 = vld [vmem:[%s1681 + $0x70] sm:$0xff]
        %v1697 = vld [vmem:[%s1681 + $0x78] sm:$0xff]
        %1698 = vmatpush.msra.mxu0 %v1697
        %1699 = vmatpush.msra.mxu0 %v1696
        %1700 = vmatpush.msra.mxu0 %v1695
        %1701 = vmatpush.msra.mxu0 %v1694
        %1702 = vmatpush.msra.mxu0 %v1693
        %1703 = vmatpush.msra.mxu0 %v1692
        %1704 = vmatpush.msra.mxu0 %v1691
        %1705 = vmatpush.msra.mxu0 %v1690
        %1706 = vmatpush.msra.mxu0 %v1689
        %1707 = vmatpush.msra.mxu0 %v1688
        %1708 = vmatpush.msra.mxu0 %v1687
        %1709 = vmatpush.msra.mxu0 %v1686
        %1710 = vmatpush.msra.mxu0 %v1685
        %1711 = vmatpush.msra.mxu0 %v1684
        %1712 = vmatpush.msra.mxu0 %v1683
        %1713 = vmatpush.msra.mxu0 %v1682
        %1714 = vmatmul.f32.gmra.mxu0 %v1679
        %v1715 = vpop.f32.mrf.mxu0
        %v1716 = vadd.f32 0.0, %v1715
        %1717 = vmatmul.f32.gmra.mxu0 %v1678
        %v1718 = vpop.f32.mrf.mxu0
        %v1719 = vadd.f32 0.0, %v1718
        %1720 = vmatmul.f32.gmra.mxu0 %v1677
        %v1721 = vpop.f32.mrf.mxu0
        %v1722 = vadd.f32 0.0, %v1721
        %1723 = vmatmul.f32.gmra.mxu0 %v1680
        %v1724 = vpop.f32.mrf.mxu0
        %v1725 = vadd.f32 0.0, %v1724
        %1726 = vdwg.mxu0
        %v1727 = vmul.f32 %v635, %v1716
        %v1728 = vmul.f32 %v636, %v1719
        %v1729 = vmul.f32 %v637, %v1722
        %v1730 = vmul.f32 %v638, %v1725
        %v1731 = vadd.f32 %v1669, %v1727
        %v1732 = vadd.f32 %v1670, %v1728
        %v1733 = vadd.f32 %v1671, %v1729
        %v1734 = vadd.f32 %v1672, %v1730
        %v1735 = vadd.f32 %v1373, %v1731
        %v1736 = vadd.f32 %v1374, %v1732
        %v1737 = vadd.f32 %v1375, %v1733
        %v1738 = vadd.f32 %v1376, %v1734
        %1739 = vst [vmem:[%s559] sm:$0xff] %v1735
        %1740 = vst [vmem:[%s559 + $0x8] sm:$0xff] %v1736
        %1741 = vst [vmem:[%s559 + $0x10] sm:$0xff] %v1737
        %1742 = vst [vmem:[%s559 + $0x18] sm:$0xff] %v1738
        %s1743 = sand.u32 %s319, 1
        %s1744 = scalar_lea.sflag [#allocation4], %s1743
        %s1745 = sand.u32 %s319, 1
        %s1746 = smul.addr %s1745, 32
        %s1747 = scalar_lea.vmem [#allocation14], %s1746
        // Predicated region
        $region101: #{tpu_custom_call.1} parent=71 // pred_check
          %p1748 = pneg %p329
        $region102: #{tpu_custom_call.1} parent=71 // pred_check_branch
          %1750 = sbr.rel (%p1748) target = $region104
        $region103: #{tpu_custom_call.1} parent=71 // pred_region
          %s1751 = smul.u32 4, %s33
          %1753 = vsyncadd %s1744, 0
          %s1754 = smul.addr %s1751, 8
          %s1755 = scalar_lea.hbm %s13, %s1754
          %s1756 = sshll.u32 %s1747, 4
          %s1757 = int_to_ptr.vmem [resolvable:$true] %s1756
          %s1758 = sshll.u32 %s1755, 4
          %s1759 = int_to_ptr.hbm [resolvable:$true] %s1758
          %1764 = dma.vmem_to_hbm [thread:$0]  %s1757, 512, %s1759, %s1744, 128, 128, 8
        $region104: #{tpu_custom_call.1} parent=71 // pred_fallthru
          _
      $region72: #{tpu_custom_call.1} parent=5 // pred_fallthru
        _
      %p1765 = scmp.le.s32.totalorder 2, %s28
      // Predicated region
      $region105: #{tpu_custom_call.1} parent=5 // pred_check
        %p1766 = pneg %p1765
      $region106: #{tpu_custom_call.1} parent=5 // pred_check_branch
        %1768 = sbr.rel (%p1766) target = $region108
      $region107: #{tpu_custom_call.1} parent=5 // pred_region
        %s1769 = ssub.s32 %s28, 2
        // Predicated region
        $region109: #{tpu_custom_call.1} parent=107 // pred_check
          %p1770 = pneg %p335
        $region110: #{tpu_custom_call.1} parent=107 // pred_check_branch
          %1772 = sbr.rel (%p1770) target = $region112
        $region111: #{tpu_custom_call.1} parent=107 // pred_region
          %s1773 = sand.u32 %s320, 1
          %s1774 = scalar_lea.sflag [#allocation4], %s1773
          %s1775 = sand.u32 %s320, 1
          %s1776 = smul.addr %s1775, 32
          %s1777 = scalar_lea.vmem [#allocation14], %s1776
          %1779 = dma.done %s1774, 512
        $region112: #{tpu_custom_call.1} parent=107 // pred_fallthru
          _
      $region108: #{tpu_custom_call.1} parent=5 // pred_fallthru
        _
    $region6: #{tpu_custom_call.1} parent=1 // loop_footer
      %s32 = sadd.s32 1, %s28
    $region7: #{tpu_custom_call.1} parent=1 // loop_footer_branch
      %27 = sbr.rel target = $region3
    $region8: #{tpu_custom_call.1} parent=1 // loop_exit
      _
    %1780 = vsyncpa [#allocation3], 1
    %s1781 = scalar_lea.sflag [#allocation3], 1
    %1782 = vsyncpa %s1781, 1
    %1783 = vsyncpa [#allocation6], 1
    %1784 = vsyncpa [#allocation9], 1
    %1785 = vsyncpa [#allocation12], 1
    %1786 = vsyncpa [#allocation4], 1
    %s1787 = scalar_lea.sflag [#allocation4], 1
    %1788 = vsyncpa %s1787, 1

</llo_original>
